<compile_context>
chip_gen: v7x
topology: tpu7x:2x2x1
jax: 0.10.0
libtpu: 0.0.40
codegen_flags: <defaults>
</compile_context>

<pallas_src>
import jax
import jax.numpy as jnp
from jax import lax
from jax.experimental import pallas as pl
from jax.experimental.pallas import tpu as pltpu


def _treelstm_kernel(x_ref, wx_ref, bx_ref, wh_ref,
                     c_out_ref, h_out_ref, hall_ref,
                     xproj_ref):
    # x_ref:   (seq*TB, in_dim)  row r = t*TB + j = tree j of this block, step t
    # wx_ref:  (in_dim, 4*mem)   [Wioux | Wfx]        (bf16 or f32)
    # bx_ref:  (1, 4*mem)        [bioux+biouh | bfx+bfh]  (f32)
    # wh_ref:  (mem, 4*mem)      [Wiouh | Wfh]        (bf16 or f32)
    # outputs: c/h (TB, mem), hall (seq*TB, mem)      (f32)
    # scratch: xproj (seq*TB, 4*mem)                  (f32)
    rows = x_ref.shape[0]
    tb = c_out_ref.shape[0]
    seq = rows // tb
    mem = wh_ref.shape[0]

    # --- Prologue: all x-dependent work as ONE batched MXU matmul.
    xproj_ref[...] = (
        jnp.dot(x_ref[...], wx_ref[...], preferred_element_type=jnp.float32)
        + bx_ref[...]
    )

    wh = wh_ref[...]  # (mem, 4*mem) fused h-side weights, resident in vregs/VMEM

    def body(step, carry):
        c, h = carry                                       # each (TB, mem) f32
        row0 = pl.multiple_of(step * tb, tb)               # sublane-aligned slice
        # Single MXU matmul per step: (TB, mem) x (mem, 4*mem) -> (TB, 4*mem)
        pre = xproj_ref[pl.ds(row0, tb), :] + jnp.dot(
            h.astype(wh.dtype), wh, preferred_element_type=jnp.float32)

        # Full-width transcendentals: 2 EUP pushes instead of 4 narrow ones.
        sig = jax.nn.sigmoid(pre)     # valid on the i / o / f lane groups
        tnh = jnp.tanh(pre)           # valid on the u lane group
        i_g = sig[:, 0 * mem:1 * mem]
        o_g = sig[:, 1 * mem:2 * mem]
        u_g = tnh[:, 2 * mem:3 * mem]
        f_g = sig[:, 3 * mem:4 * mem]

        c_new = i_g * u_g + f_g * c        # single child -> sum is identity
        h_new = o_g * jnp.tanh(c_new)

        hall_ref[pl.ds(row0, tb), :] = h_new   # full-sublane (TB, mem) store
        return (c_new, h_new)

    c0 = jnp.zeros((tb, mem), jnp.float32)
    h0 = jnp.zeros((tb, mem), jnp.float32)
    unroll = seq if seq <= 16 else 8          # bounded unroll for long seq
    c_fin, h_fin = lax.fori_loop(0, seq, body, (c0, h0), unroll=unroll)

    c_out_ref[...] = c_fin
    h_out_ref[...] = h_fin


def child_sum_tree_lstm(x, params, *, trees_per_block=8, use_bf16=True):
    """x: (B, seq, in_dim) f32 — B independent chain trees (B=1 reproduces the
    original single-tree module). Returns (c, h, h_all) with shapes
    (B, mem), (B, mem), (B, seq, mem)."""
    B, seq, in_dim = x.shape
    mem = params["wfh"].shape[1]

    tb = min(trees_per_block, B)
    while B % tb:
        tb -= 1
    nblk = B // tb

    mat_dtype = jnp.bfloat16 if use_bf16 else jnp.float32

    # Fuse weights / biases once in the wrapper (outside the serial path).
    wx = jnp.concatenate([params["wioux"], params["wfx"]], axis=1).astype(mat_dtype)
    bx = jnp.concatenate([params["bioux"] + params["biouh"],
                          params["bfx"] + params["bfh"]], axis=1)          # f32
    wh = jnp.concatenate([params["wiouh"], params["wfh"]], axis=1).astype(mat_dtype)

    # Re-layout x to (nblk, seq*tb, in_dim): row t*tb + j == tree blk*tb+j, step t.
    xb = (x.reshape(nblk, tb, seq, in_dim)
            .transpose(0, 2, 1, 3)
            .reshape(nblk, seq * tb, in_dim)
            .astype(mat_dtype))

    out_shapes = (jax.ShapeDtypeStruct((nblk, tb, mem), jnp.float32),       # c
                  jax.ShapeDtypeStruct((nblk, tb, mem), jnp.float32),       # h
                  jax.ShapeDtypeStruct((nblk, seq * tb, mem), jnp.float32)) # h_all

    c, h, hall = pl.pallas_call(
        _treelstm_kernel,
        out_shape=out_shapes,
        grid=(nblk,),
        in_specs=[
            pl.BlockSpec((None, seq * tb, in_dim), lambda b: (b, 0, 0)),
            pl.BlockSpec((in_dim, 4 * mem), lambda b: (0, 0)),  # weights resident
            pl.BlockSpec((1, 4 * mem), lambda b: (0, 0)),
            pl.BlockSpec((mem, 4 * mem), lambda b: (0, 0)),
        ],
        out_specs=(
            pl.BlockSpec((None, tb, mem), lambda b: (b, 0, 0)),
            pl.BlockSpec((None, tb, mem), lambda b: (b, 0, 0)),
            pl.BlockSpec((None, seq * tb, mem), lambda b: (b, 0, 0)),
        ),
        scratch_shapes=[pltpu.VMEM((seq * tb, 4 * mem), jnp.float32)],  # X_proj
        compiler_params=pltpu.CompilerParams(
            dimension_semantics=("parallel",)),  # shard tree blocks over v7x TCs
    )(xb, wx, bx, wh)

    c = c.reshape(B, mem)
    h = h.reshape(B, mem)
    h_all = (hall.reshape(nblk, seq, tb, mem)
                  .transpose(0, 2, 1, 3)
                  .reshape(B, seq, mem))
    return c, h, h_all


def init_params(key, in_dim, mem_dim):
    """Deterministic synthetic params; PyTorch Linear weight (out,in) stored transposed."""
    ks = jax.random.split(key, 8)
    s_in = 1.0 / jnp.sqrt(in_dim)
    s_mem = 1.0 / jnp.sqrt(mem_dim)
    return {
        "wioux": jax.random.uniform(ks[0], (in_dim, 3 * mem_dim), jnp.float32, -s_in, s_in),
        "bioux": jax.random.uniform(ks[1], (1, 3 * mem_dim), jnp.float32, -s_in, s_in),
        "wiouh": jax.random.uniform(ks[2], (mem_dim, 3 * mem_dim), jnp.float32, -s_mem, s_mem),
        "biouh": jax.random.uniform(ks[3], (1, 3 * mem_dim), jnp.float32, -s_mem, s_mem),
        "wfx":   jax.random.uniform(ks[4], (in_dim, mem_dim), jnp.float32, -s_in, s_in),
        "bfx":   jax.random.uniform(ks[5], (1, mem_dim), jnp.float32, -s_in, s_in),
        "wfh":   jax.random.uniform(ks[6], (mem_dim, mem_dim), jnp.float32, -s_mem, s_mem),
        "bfh":   jax.random.uniform(ks[7], (1, mem_dim), jnp.float32, -s_mem, s_mem),
    }


def _reference_single(x, p):
    """Pure-JAX reference replicating the PyTorch forward exactly (one tree)."""
    mem = p["wfh"].shape[1]

    def step(carry, x_t):
        c, h = carry
        x_t = x_t[None, :]
        iou = x_t @ p["wioux"] + p["bioux"] + h @ p["wiouh"] + p["biouh"]
        i_g = jax.nn.sigmoid(iou[:, :mem])
        o_g = jax.nn.sigmoid(iou[:, mem:2 * mem])
        u_g = jnp.tanh(iou[:, 2 * mem:])
        f_g = jax.nn.sigmoid(h @ p["wfh"] + p["bfh"] + x_t @ p["wfx"] + p["bfx"])
        c_new = i_g * u_g + jnp.sum(f_g * c, axis=0, keepdims=True)
        h_new = o_g * jnp.tanh(c_new)
        return (c_new, h_new), h_new[0]

    c0 = jnp.zeros((1, mem), jnp.float32)
    h0 = jnp.zeros((1, mem), jnp.float32)
    (c, h), h_all = lax.scan(step, (c0, h0), x)
    return c[0], h[0], h_all


def reference(xb, p):
    return jax.vmap(lambda x: _reference_single(x, p))(xb)


if __name__ == "__main__":
    B, seq, in_dim, mem_dim = 16, 8, 32, 32
    key = jax.random.PRNGKey(0)
    k_x, k_p = jax.random.split(key)
    x = jax.random.normal(k_x, (B, seq, in_dim), jnp.float32)
    params = init_params(k_p, in_dim, mem_dim)

    c_ref, h_ref, hall_ref = reference(x, params)

    # f32 validation path: tight tolerance vs the PyTorch-equivalent reference.
    c32, h32, hall32 = child_sum_tree_lstm(x, params, use_bf16=False)
    jax.block_until_ready((c32, h32, hall32))
    assert jnp.allclose(c32, c_ref, atol=1e-4, rtol=1e-4)
    assert jnp.allclose(h32, h_ref, atol=1e-4, rtol=1e-4)
    assert jnp.allclose(hall32, hall_ref, atol=1e-4, rtol=1e-4)

    # bf16-MXU performance path (default): loose tolerance vs f32 reference.
    c16, h16, hall16 = child_sum_tree_lstm(x, params, use_bf16=True)
    jax.block_until_ready((c16, h16, hall16))
    assert jnp.allclose(c16, c_ref, atol=5e-2, rtol=5e-2)
    assert jnp.allclose(h16, h_ref, atol=5e-2, rtol=5e-2)
    assert jnp.allclose(hall16, hall_ref, atol=5e-2, rtol=5e-2)

    print("KERNEL_OK")
</pallas_src>

<mosaic_0001>
module attributes {stable_mosaic.version = 11 : i64} {
  func.func @_treelstm_kernel(%arg0: i32, %arg1: memref<1x64x32xf32, #tpu.memory_space<vmem>>, %arg2: memref<32x128xf32, #tpu.memory_space<vmem>>, %arg3: memref<1x128xf32, #tpu.memory_space<vmem>>, %arg4: memref<32x128xf32, #tpu.memory_space<vmem>>, %arg5: memref<1x8x32xf32, #tpu.memory_space<vmem>>, %arg6: memref<1x8x32xf32, #tpu.memory_space<vmem>>, %arg7: memref<1x64x32xf32, #tpu.memory_space<vmem>>, %arg8: memref<64x128xf32, #tpu.memory_space<vmem>>) attributes {dimension_semantics = [#tpu.dimension_semantics<parallel>], iteration_bounds = array<i64: 2>, scalar_prefetch = 0 : i64, scratch_operands = 1 : i64, tpu.core_type = #tpu.core_type<tc>, window_params = [{transform_indices = @transform_0, window_bounds = array<i64: 1, 64, 32>}, {pipeline_mode = #tpu.pipeline_mode<synchronous>, transform_indices = @transform_1, window_bounds = array<i64: 32, 128>}, {pipeline_mode = #tpu.pipeline_mode<synchronous>, transform_indices = @transform_2, window_bounds = array<i64: 1, 128>}, {pipeline_mode = #tpu.pipeline_mode<synchronous>, transform_indices = @transform_3, window_bounds = array<i64: 32, 128>}, {transform_indices = @transform_4, window_bounds = array<i64: 1, 8, 32>}, {transform_indices = @transform_5, window_bounds = array<i64: 1, 8, 32>}, {transform_indices = @transform_6, window_bounds = array<i64: 1, 64, 32>}]} {
    %c0 = arith.constant 0 : index
    %c0_0 = arith.constant 0 : index
    %c0_1 = arith.constant 0 : index
    %0 = vector.load %arg1[%c0, %c0_0, %c0_1] : memref<1x64x32xf32, #tpu.memory_space<vmem>>, vector<1x64x32xf32>
    %1 = vector.shape_cast %0 : vector<1x64x32xf32> to vector<64x32xf32>
    %c0_2 = arith.constant 0 : index
    %c0_3 = arith.constant 0 : index
    %2 = vector.load %arg2[%c0_2, %c0_3] : memref<32x128xf32, #tpu.memory_space<vmem>>, vector<32x128xf32>
    %cst = arith.constant dense<0.000000e+00> : vector<64x128xf32>
    %3 = tpu.matmul %1, %2, %cst {dimension_numbers = #tpu.dot_dimension_numbers<[1], [0], [0], [1], [0, 0, 1, 1], [], []>} : vector<64x32xf32>, vector<32x128xf32>, vector<64x128xf32> -> vector<64x128xf32>
    %c0_4 = arith.constant 0 : index
    %c0_5 = arith.constant 0 : index
    %4 = vector.load %arg3[%c0_4, %c0_5] : memref<1x128xf32, #tpu.memory_space<vmem>>, vector<1x128xf32>
    %5 = vector.broadcast %4 : vector<1x128xf32> to vector<64x128xf32>
    %6 = arith.addf %3, %5 : vector<64x128xf32>
    %c0_6 = arith.constant 0 : index
    %c0_7 = arith.constant 0 : index
    %7 = vector.load %arg8[%c0_6, %c0_7] : memref<64x128xf32, #tpu.memory_space<vmem>>, vector<64x128xf32>
    tpu.vector_store %arg8[%c0_6, %c0_7], %6 {strides = array<i32>} : memref<64x128xf32, #tpu.memory_space<vmem>>, vector<64x128xf32>,
    %c0_8 = arith.constant 0 : index
    %c0_9 = arith.constant 0 : index
    %8 = vector.load %arg4[%c0_8, %c0_9] : memref<32x128xf32, #tpu.memory_space<vmem>>, vector<32x128xf32>
    %cst_10 = arith.constant 0.000000e+00 : f32
    %9 = vector.broadcast %cst_10 : f32 to vector<8x32xf32>
    %cst_11 = arith.constant 0.000000e+00 : f32
    %10 = vector.broadcast %cst_11 : f32 to vector<8x32xf32>
    %c0_i32 = arith.constant 0 : i32
    %c8_i32 = arith.constant 8 : i32
    %11 = arith.muli %c0_i32, %c8_i32 : i32
    %12 = tpu.assume_multiple %11, 8 : i32
    %13 = arith.index_cast %12 : i32 to index
    %c0_12 = arith.constant 0 : index
    %14 = vector.load %arg8[%13, %c0_12] : memref<64x128xf32, #tpu.memory_space<vmem>>, vector<8x128xf32>
    %cst_13 = arith.constant dense<0.000000e+00> : vector<8x128xf32>
    %15 = tpu.matmul %10, %8, %cst_13 {dimension_numbers = #tpu.dot_dimension_numbers<[1], [0], [0], [1], [0, 0, 1, 1], [], []>} : vector<8x32xf32>, vector<32x128xf32>, vector<8x128xf32> -> vector<8x128xf32>
    %16 = arith.addf %14, %15 : vector<8x128xf32>
    %17 = arith.negf %16 : vector<8x128xf32>
    %18 = math.exp %17 : vector<8x128xf32>
    %cst_14 = arith.constant 1.000000e+00 : f32
    %19 = vector.broadcast %cst_14 : f32 to vector<8x128xf32>
    %20 = arith.addf %19, %18 : vector<8x128xf32>
    %21 = arith.divf %19, %20 : vector<8x128xf32>
    %22 = math.tanh %16 : vector<8x128xf32>
    %23 = vector.extract_strided_slice %21 {offsets = [0, 0], sizes = [8, 32], strides = [1, 1]} : vector<8x128xf32> to vector<8x32xf32>
    %24 = vector.extract_strided_slice %21 {offsets = [0, 32], sizes = [8, 32], strides = [1, 1]} : vector<8x128xf32> to vector<8x32xf32>
    %25 = vector.extract_strided_slice %22 {offsets = [0, 64], sizes = [8, 32], strides = [1, 1]} : vector<8x128xf32> to vector<8x32xf32>
    %26 = vector.extract_strided_slice %21 {offsets = [0, 96], sizes = [8, 32], strides = [1, 1]} : vector<8x128xf32> to vector<8x32xf32>
    %27 = arith.mulf %23, %25 : vector<8x32xf32>
    %28 = arith.mulf %26, %9 : vector<8x32xf32>
    %29 = arith.addf %27, %28 : vector<8x32xf32>
    %30 = math.tanh %29 : vector<8x32xf32>
    %31 = arith.mulf %24, %30 : vector<8x32xf32>
    %c0_15 = arith.constant 0 : index
    %32 = arith.index_cast %12 : i32 to index
    %c0_16 = arith.constant 0 : index
    %33 = vector.load %arg7[%c0_15, %32, %c0_16] : memref<1x64x32xf32, #tpu.memory_space<vmem>>, vector<1x8x32xf32>
    %34 = vector.shape_cast %33 : vector<1x8x32xf32> to vector<8x32xf32>
    %35 = vector.shape_cast %31 : vector<8x32xf32> to vector<1x8x32xf32>
    tpu.vector_store %arg7[%c0_15, %32, %c0_16], %35 {strides = array<i32>} : memref<1x64x32xf32, #tpu.memory_space<vmem>>, vector<1x8x32xf32>,
    %c1_i32 = arith.constant 1 : i32
    %c8_i32_17 = arith.constant 8 : i32
    %36 = arith.muli %c1_i32, %c8_i32_17 : i32
    %37 = tpu.assume_multiple %36, 8 : i32
    %38 = arith.index_cast %37 : i32 to index
    %c0_18 = arith.constant 0 : index
    %39 = vector.load %arg8[%38, %c0_18] : memref<64x128xf32, #tpu.memory_space<vmem>>, vector<8x128xf32>
    %cst_19 = arith.constant dense<0.000000e+00> : vector<8x128xf32>
    %40 = tpu.matmul %31, %8, %cst_19 {dimension_numbers = #tpu.dot_dimension_numbers<[1], [0], [0], [1], [0, 0, 1, 1], [], []>} : vector<8x32xf32>, vector<32x128xf32>, vector<8x128xf32> -> vector<8x128xf32>
    %41 = arith.addf %39, %40 : vector<8x128xf32>
    %42 = arith.negf %41 : vector<8x128xf32>
    %43 = math.exp %42 : vector<8x128xf32>
    %cst_20 = arith.constant 1.000000e+00 : f32
    %44 = vector.broadcast %cst_20 : f32 to vector<8x128xf32>
    %45 = arith.addf %44, %43 : vector<8x128xf32>
    %46 = arith.divf %44, %45 : vector<8x128xf32>
    %47 = math.tanh %41 : vector<8x128xf32>
    %48 = vector.extract_strided_slice %46 {offsets = [0, 0], sizes = [8, 32], strides = [1, 1]} : vector<8x128xf32> to vector<8x32xf32>
    %49 = vector.extract_strided_slice %46 {offsets = [0, 32], sizes = [8, 32], strides = [1, 1]} : vector<8x128xf32> to vector<8x32xf32>
    %50 = vector.extract_strided_slice %47 {offsets = [0, 64], sizes = [8, 32], strides = [1, 1]} : vector<8x128xf32> to vector<8x32xf32>
    %51 = vector.extract_strided_slice %46 {offsets = [0, 96], sizes = [8, 32], strides = [1, 1]} : vector<8x128xf32> to vector<8x32xf32>
    %52 = arith.mulf %48, %50 : vector<8x32xf32>
    %53 = arith.mulf %51, %29 : vector<8x32xf32>
    %54 = arith.addf %52, %53 : vector<8x32xf32>
    %55 = math.tanh %54 : vector<8x32xf32>
    %56 = arith.mulf %49, %55 : vector<8x32xf32>
    %c0_21 = arith.constant 0 : index
    %57 = arith.index_cast %37 : i32 to index
    %c0_22 = arith.constant 0 : index
    %58 = vector.load %arg7[%c0_21, %57, %c0_22] : memref<1x64x32xf32, #tpu.memory_space<vmem>>, vector<1x8x32xf32>
    %59 = vector.shape_cast %58 : vector<1x8x32xf32> to vector<8x32xf32>
    %60 = vector.shape_cast %56 : vector<8x32xf32> to vector<1x8x32xf32>
    tpu.vector_store %arg7[%c0_21, %57, %c0_22], %60 {strides = array<i32>} : memref<1x64x32xf32, #tpu.memory_space<vmem>>, vector<1x8x32xf32>,
    %c2_i32 = arith.constant 2 : i32
    %c8_i32_23 = arith.constant 8 : i32
    %61 = arith.muli %c2_i32, %c8_i32_23 : i32
    %62 = tpu.assume_multiple %61, 8 : i32
    %63 = arith.index_cast %62 : i32 to index
    %c0_24 = arith.constant 0 : index
    %64 = vector.load %arg8[%63, %c0_24] : memref<64x128xf32, #tpu.memory_space<vmem>>, vector<8x128xf32>
    %cst_25 = arith.constant dense<0.000000e+00> : vector<8x128xf32>
    %65 = tpu.matmul %56, %8, %cst_25 {dimension_numbers = #tpu.dot_dimension_numbers<[1], [0], [0], [1], [0, 0, 1, 1], [], []>} : vector<8x32xf32>, vector<32x128xf32>, vector<8x128xf32> -> vector<8x128xf32>
    %66 = arith.addf %64, %65 : vector<8x128xf32>
    %67 = arith.negf %66 : vector<8x128xf32>
    %68 = math.exp %67 : vector<8x128xf32>
    %cst_26 = arith.constant 1.000000e+00 : f32
    %69 = vector.broadcast %cst_26 : f32 to vector<8x128xf32>
    %70 = arith.addf %69, %68 : vector<8x128xf32>
    %71 = arith.divf %69, %70 : vector<8x128xf32>
    %72 = math.tanh %66 : vector<8x128xf32>
    %73 = vector.extract_strided_slice %71 {offsets = [0, 0], sizes = [8, 32], strides = [1, 1]} : vector<8x128xf32> to vector<8x32xf32>
    %74 = vector.extract_strided_slice %71 {offsets = [0, 32], sizes = [8, 32], strides = [1, 1]} : vector<8x128xf32> to vector<8x32xf32>
    %75 = vector.extract_strided_slice %72 {offsets = [0, 64], sizes = [8, 32], strides = [1, 1]} : vector<8x128xf32> to vector<8x32xf32>
    %76 = vector.extract_strided_slice %71 {offsets = [0, 96], sizes = [8, 32], strides = [1, 1]} : vector<8x128xf32> to vector<8x32xf32>
    %77 = arith.mulf %73, %75 : vector<8x32xf32>
    %78 = arith.mulf %76, %54 : vector<8x32xf32>
    %79 = arith.addf %77, %78 : vector<8x32xf32>
    %80 = math.tanh %79 : vector<8x32xf32>
    %81 = arith.mulf %74, %80 : vector<8x32xf32>
    %c0_27 = arith.constant 0 : index
    %82 = arith.index_cast %62 : i32 to index
    %c0_28 = arith.constant 0 : index
    %83 = vector.load %arg7[%c0_27, %82, %c0_28] : memref<1x64x32xf32, #tpu.memory_space<vmem>>, vector<1x8x32xf32>
    %84 = vector.shape_cast %83 : vector<1x8x32xf32> to vector<8x32xf32>
    %85 = vector.shape_cast %81 : vector<8x32xf32> to vector<1x8x32xf32>
    tpu.vector_store %arg7[%c0_27, %82, %c0_28], %85 {strides = array<i32>} : memref<1x64x32xf32, #tpu.memory_space<vmem>>, vector<1x8x32xf32>,
    %c3_i32 = arith.constant 3 : i32
    %c8_i32_29 = arith.constant 8 : i32
    %86 = arith.muli %c3_i32, %c8_i32_29 : i32
    %87 = tpu.assume_multiple %86, 8 : i32
    %88 = arith.index_cast %87 : i32 to index
    %c0_30 = arith.constant 0 : index
    %89 = vector.load %arg8[%88, %c0_30] : memref<64x128xf32, #tpu.memory_space<vmem>>, vector<8x128xf32>
    %cst_31 = arith.constant dense<0.000000e+00> : vector<8x128xf32>
    %90 = tpu.matmul %81, %8, %cst_31 {dimension_numbers = #tpu.dot_dimension_numbers<[1], [0], [0], [1], [0, 0, 1, 1], [], []>} : vector<8x32xf32>, vector<32x128xf32>, vector<8x128xf32> -> vector<8x128xf32>
    %91 = arith.addf %89, %90 : vector<8x128xf32>
    %92 = arith.negf %91 : vector<8x128xf32>
    %93 = math.exp %92 : vector<8x128xf32>
    %cst_32 = arith.constant 1.000000e+00 : f32
    %94 = vector.broadcast %cst_32 : f32 to vector<8x128xf32>
    %95 = arith.addf %94, %93 : vector<8x128xf32>
    %96 = arith.divf %94, %95 : vector<8x128xf32>
    %97 = math.tanh %91 : vector<8x128xf32>
    %98 = vector.extract_strided_slice %96 {offsets = [0, 0], sizes = [8, 32], strides = [1, 1]} : vector<8x128xf32> to vector<8x32xf32>
    %99 = vector.extract_strided_slice %96 {offsets = [0, 32], sizes = [8, 32], strides = [1, 1]} : vector<8x128xf32> to vector<8x32xf32>
    %100 = vector.extract_strided_slice %97 {offsets = [0, 64], sizes = [8, 32], strides = [1, 1]} : vector<8x128xf32> to vector<8x32xf32>
    %101 = vector.extract_strided_slice %96 {offsets = [0, 96], sizes = [8, 32], strides = [1, 1]} : vector<8x128xf32> to vector<8x32xf32>
    %102 = arith.mulf %98, %100 : vector<8x32xf32>
    %103 = arith.mulf %101, %79 : vector<8x32xf32>
    %104 = arith.addf %102, %103 : vector<8x32xf32>
    %105 = math.tanh %104 : vector<8x32xf32>
    %106 = arith.mulf %99, %105 : vector<8x32xf32>
    %c0_33 = arith.constant 0 : index
    %107 = arith.index_cast %87 : i32 to index
    %c0_34 = arith.constant 0 : index
    %108 = vector.load %arg7[%c0_33, %107, %c0_34] : memref<1x64x32xf32, #tpu.memory_space<vmem>>, vector<1x8x32xf32>
    %109 = vector.shape_cast %108 : vector<1x8x32xf32> to vector<8x32xf32>
    %110 = vector.shape_cast %106 : vector<8x32xf32> to vector<1x8x32xf32>
    tpu.vector_store %arg7[%c0_33, %107, %c0_34], %110 {strides = array<i32>} : memref<1x64x32xf32, #tpu.memory_space<vmem>>, vector<1x8x32xf32>,
    %c4_i32 = arith.constant 4 : i32
    %c8_i32_35 = arith.constant 8 : i32
    %111 = arith.muli %c4_i32, %c8_i32_35 : i32
    %112 = tpu.assume_multiple %111, 8 : i32
    %113 = arith.index_cast %112 : i32 to index
    %c0_36 = arith.constant 0 : index
    %114 = vector.load %arg8[%113, %c0_36] : memref<64x128xf32, #tpu.memory_space<vmem>>, vector<8x128xf32>
    %cst_37 = arith.constant dense<0.000000e+00> : vector<8x128xf32>
    %115 = tpu.matmul %106, %8, %cst_37 {dimension_numbers = #tpu.dot_dimension_numbers<[1], [0], [0], [1], [0, 0, 1, 1], [], []>} : vector<8x32xf32>, vector<32x128xf32>, vector<8x128xf32> -> vector<8x128xf32>
    %116 = arith.addf %114, %115 : vector<8x128xf32>
    %117 = arith.negf %116 : vector<8x128xf32>
    %118 = math.exp %117 : vector<8x128xf32>
    %cst_38 = arith.constant 1.000000e+00 : f32
    %119 = vector.broadcast %cst_38 : f32 to vector<8x128xf32>
    %120 = arith.addf %119, %118 : vector<8x128xf32>
    %121 = arith.divf %119, %120 : vector<8x128xf32>
    %122 = math.tanh %116 : vector<8x128xf32>
    %123 = vector.extract_strided_slice %121 {offsets = [0, 0], sizes = [8, 32], strides = [1, 1]} : vector<8x128xf32> to vector<8x32xf32>
    %124 = vector.extract_strided_slice %121 {offsets = [0, 32], sizes = [8, 32], strides = [1, 1]} : vector<8x128xf32> to vector<8x32xf32>
    %125 = vector.extract_strided_slice %122 {offsets = [0, 64], sizes = [8, 32], strides = [1, 1]} : vector<8x128xf32> to vector<8x32xf32>
    %126 = vector.extract_strided_slice %121 {offsets = [0, 96], sizes = [8, 32], strides = [1, 1]} : vector<8x128xf32> to vector<8x32xf32>
    %127 = arith.mulf %123, %125 : vector<8x32xf32>
    %128 = arith.mulf %126, %104 : vector<8x32xf32>
    %129 = arith.addf %127, %128 : vector<8x32xf32>
    %130 = math.tanh %129 : vector<8x32xf32>
    %131 = arith.mulf %124, %130 : vector<8x32xf32>
    %c0_39 = arith.constant 0 : index
    %132 = arith.index_cast %112 : i32 to index
    %c0_40 = arith.constant 0 : index
    %133 = vector.load %arg7[%c0_39, %132, %c0_40] : memref<1x64x32xf32, #tpu.memory_space<vmem>>, vector<1x8x32xf32>
    %134 = vector.shape_cast %133 : vector<1x8x32xf32> to vector<8x32xf32>
    %135 = vector.shape_cast %131 : vector<8x32xf32> to vector<1x8x32xf32>
    tpu.vector_store %arg7[%c0_39, %132, %c0_40], %135 {strides = array<i32>} : memref<1x64x32xf32, #tpu.memory_space<vmem>>, vector<1x8x32xf32>,
    %c5_i32 = arith.constant 5 : i32
    %c8_i32_41 = arith.constant 8 : i32
    %136 = arith.muli %c5_i32, %c8_i32_41 : i32
    %137 = tpu.assume_multiple %136, 8 : i32
    %138 = arith.index_cast %137 : i32 to index
    %c0_42 = arith.constant 0 : index
    %139 = vector.load %arg8[%138, %c0_42] : memref<64x128xf32, #tpu.memory_space<vmem>>, vector<8x128xf32>
    %cst_43 = arith.constant dense<0.000000e+00> : vector<8x128xf32>
    %140 = tpu.matmul %131, %8, %cst_43 {dimension_numbers = #tpu.dot_dimension_numbers<[1], [0], [0], [1], [0, 0, 1, 1], [], []>} : vector<8x32xf32>, vector<32x128xf32>, vector<8x128xf32> -> vector<8x128xf32>
    %141 = arith.addf %139, %140 : vector<8x128xf32>
    %142 = arith.negf %141 : vector<8x128xf32>
    %143 = math.exp %142 : vector<8x128xf32>
    %cst_44 = arith.constant 1.000000e+00 : f32
    %144 = vector.broadcast %cst_44 : f32 to vector<8x128xf32>
    %145 = arith.addf %144, %143 : vector<8x128xf32>
    %146 = arith.divf %144, %145 : vector<8x128xf32>
    %147 = math.tanh %141 : vector<8x128xf32>
    %148 = vector.extract_strided_slice %146 {offsets = [0, 0], sizes = [8, 32], strides = [1, 1]} : vector<8x128xf32> to vector<8x32xf32>
    %149 = vector.extract_strided_slice %146 {offsets = [0, 32], sizes = [8, 32], strides = [1, 1]} : vector<8x128xf32> to vector<8x32xf32>
    %150 = vector.extract_strided_slice %147 {offsets = [0, 64], sizes = [8, 32], strides = [1, 1]} : vector<8x128xf32> to vector<8x32xf32>
    %151 = vector.extract_strided_slice %146 {offsets = [0, 96], sizes = [8, 32], strides = [1, 1]} : vector<8x128xf32> to vector<8x32xf32>
    %152 = arith.mulf %148, %150 : vector<8x32xf32>
    %153 = arith.mulf %151, %129 : vector<8x32xf32>
    %154 = arith.addf %152, %153 : vector<8x32xf32>
    %155 = math.tanh %154 : vector<8x32xf32>
    %156 = arith.mulf %149, %155 : vector<8x32xf32>
    %c0_45 = arith.constant 0 : index
    %157 = arith.index_cast %137 : i32 to index
    %c0_46 = arith.constant 0 : index
    %158 = vector.load %arg7[%c0_45, %157, %c0_46] : memref<1x64x32xf32, #tpu.memory_space<vmem>>, vector<1x8x32xf32>
    %159 = vector.shape_cast %158 : vector<1x8x32xf32> to vector<8x32xf32>
    %160 = vector.shape_cast %156 : vector<8x32xf32> to vector<1x8x32xf32>
    tpu.vector_store %arg7[%c0_45, %157, %c0_46], %160 {strides = array<i32>} : memref<1x64x32xf32, #tpu.memory_space<vmem>>, vector<1x8x32xf32>,
    %c6_i32 = arith.constant 6 : i32
    %c8_i32_47 = arith.constant 8 : i32
    %161 = arith.muli %c6_i32, %c8_i32_47 : i32
    %162 = tpu.assume_multiple %161, 8 : i32
    %163 = arith.index_cast %162 : i32 to index
    %c0_48 = arith.constant 0 : index
    %164 = vector.load %arg8[%163, %c0_48] : memref<64x128xf32, #tpu.memory_space<vmem>>, vector<8x128xf32>
    %cst_49 = arith.constant dense<0.000000e+00> : vector<8x128xf32>
    %165 = tpu.matmul %156, %8, %cst_49 {dimension_numbers = #tpu.dot_dimension_numbers<[1], [0], [0], [1], [0, 0, 1, 1], [], []>} : vector<8x32xf32>, vector<32x128xf32>, vector<8x128xf32> -> vector<8x128xf32>
    %166 = arith.addf %164, %165 : vector<8x128xf32>
    %167 = arith.negf %166 : vector<8x128xf32>
    %168 = math.exp %167 : vector<8x128xf32>
    %cst_50 = arith.constant 1.000000e+00 : f32
    %169 = vector.broadcast %cst_50 : f32 to vector<8x128xf32>
    %170 = arith.addf %169, %168 : vector<8x128xf32>
    %171 = arith.divf %169, %170 : vector<8x128xf32>
    %172 = math.tanh %166 : vector<8x128xf32>
    %173 = vector.extract_strided_slice %171 {offsets = [0, 0], sizes = [8, 32], strides = [1, 1]} : vector<8x128xf32> to vector<8x32xf32>
    %174 = vector.extract_strided_slice %171 {offsets = [0, 32], sizes = [8, 32], strides = [1, 1]} : vector<8x128xf32> to vector<8x32xf32>
    %175 = vector.extract_strided_slice %172 {offsets = [0, 64], sizes = [8, 32], strides = [1, 1]} : vector<8x128xf32> to vector<8x32xf32>
    %176 = vector.extract_strided_slice %171 {offsets = [0, 96], sizes = [8, 32], strides = [1, 1]} : vector<8x128xf32> to vector<8x32xf32>
    %177 = arith.mulf %173, %175 : vector<8x32xf32>
    %178 = arith.mulf %176, %154 : vector<8x32xf32>
    %179 = arith.addf %177, %178 : vector<8x32xf32>
    %180 = math.tanh %179 : vector<8x32xf32>
    %181 = arith.mulf %174, %180 : vector<8x32xf32>
    %c0_51 = arith.constant 0 : index
    %182 = arith.index_cast %162 : i32 to index
    %c0_52 = arith.constant 0 : index
    %183 = vector.load %arg7[%c0_51, %182, %c0_52] : memref<1x64x32xf32, #tpu.memory_space<vmem>>, vector<1x8x32xf32>
    %184 = vector.shape_cast %183 : vector<1x8x32xf32> to vector<8x32xf32>
    %185 = vector.shape_cast %181 : vector<8x32xf32> to vector<1x8x32xf32>
    tpu.vector_store %arg7[%c0_51, %182, %c0_52], %185 {strides = array<i32>} : memref<1x64x32xf32, #tpu.memory_space<vmem>>, vector<1x8x32xf32>,
    %c7_i32 = arith.constant 7 : i32
    %c8_i32_53 = arith.constant 8 : i32
    %186 = arith.muli %c7_i32, %c8_i32_53 : i32
    %187 = tpu.assume_multiple %186, 8 : i32
    %188 = arith.index_cast %187 : i32 to index
    %c0_54 = arith.constant 0 : index
    %189 = vector.load %arg8[%188, %c0_54] : memref<64x128xf32, #tpu.memory_space<vmem>>, vector<8x128xf32>
    %cst_55 = arith.constant dense<0.000000e+00> : vector<8x128xf32>
    %190 = tpu.matmul %181, %8, %cst_55 {dimension_numbers = #tpu.dot_dimension_numbers<[1], [0], [0], [1], [0, 0, 1, 1], [], []>} : vector<8x32xf32>, vector<32x128xf32>, vector<8x128xf32> -> vector<8x128xf32>
    %191 = arith.addf %189, %190 : vector<8x128xf32>
    %192 = arith.negf %191 : vector<8x128xf32>
    %193 = math.exp %192 : vector<8x128xf32>
    %cst_56 = arith.constant 1.000000e+00 : f32
    %194 = vector.broadcast %cst_56 : f32 to vector<8x128xf32>
    %195 = arith.addf %194, %193 : vector<8x128xf32>
    %196 = arith.divf %194, %195 : vector<8x128xf32>
    %197 = math.tanh %191 : vector<8x128xf32>
    %198 = vector.extract_strided_slice %196 {offsets = [0, 0], sizes = [8, 32], strides = [1, 1]} : vector<8x128xf32> to vector<8x32xf32>
    %199 = vector.extract_strided_slice %196 {offsets = [0, 32], sizes = [8, 32], strides = [1, 1]} : vector<8x128xf32> to vector<8x32xf32>
    %200 = vector.extract_strided_slice %197 {offsets = [0, 64], sizes = [8, 32], strides = [1, 1]} : vector<8x128xf32> to vector<8x32xf32>
    %201 = vector.extract_strided_slice %196 {offsets = [0, 96], sizes = [8, 32], strides = [1, 1]} : vector<8x128xf32> to vector<8x32xf32>
    %202 = arith.mulf %198, %200 : vector<8x32xf32>
    %203 = arith.mulf %201, %179 : vector<8x32xf32>
    %204 = arith.addf %202, %203 : vector<8x32xf32>
    %205 = math.tanh %204 : vector<8x32xf32>
    %206 = arith.mulf %199, %205 : vector<8x32xf32>
    %c0_57 = arith.constant 0 : index
    %207 = arith.index_cast %187 : i32 to index
    %c0_58 = arith.constant 0 : index
    %208 = vector.load %arg7[%c0_57, %207, %c0_58] : memref<1x64x32xf32, #tpu.memory_space<vmem>>, vector<1x8x32xf32>
    %209 = vector.shape_cast %208 : vector<1x8x32xf32> to vector<8x32xf32>
    %210 = vector.shape_cast %206 : vector<8x32xf32> to vector<1x8x32xf32>
    tpu.vector_store %arg7[%c0_57, %207, %c0_58], %210 {strides = array<i32>} : memref<1x64x32xf32, #tpu.memory_space<vmem>>, vector<1x8x32xf32>,
    %c8_i32_59 = arith.constant 8 : i32
    %c0_60 = arith.constant 0 : index
    %c0_61 = arith.constant 0 : index
    %c0_62 = arith.constant 0 : index
    %211 = vector.load %arg5[%c0_60, %c0_61, %c0_62] : memref<1x8x32xf32, #tpu.memory_space<vmem>>, vector<1x8x32xf32>
    %212 = vector.shape_cast %211 : vector<1x8x32xf32> to vector<8x32xf32>
    %213 = vector.shape_cast %204 : vector<8x32xf32> to vector<1x8x32xf32>
    tpu.vector_store %arg5[%c0_60, %c0_61, %c0_62], %213 {strides = array<i32>} : memref<1x8x32xf32, #tpu.memory_space<vmem>>, vector<1x8x32xf32>,
    %c0_63 = arith.constant 0 : index
    %c0_64 = arith.constant 0 : index
    %c0_65 = arith.constant 0 : index
    %214 = vector.load %arg6[%c0_63, %c0_64, %c0_65] : memref<1x8x32xf32, #tpu.memory_space<vmem>>, vector<1x8x32xf32>
    %215 = vector.shape_cast %214 : vector<1x8x32xf32> to vector<8x32xf32>
    %216 = vector.shape_cast %206 : vector<8x32xf32> to vector<1x8x32xf32>
    tpu.vector_store %arg6[%c0_63, %c0_64, %c0_65], %216 {strides = array<i32>} : memref<1x8x32xf32, #tpu.memory_space<vmem>>, vector<1x8x32xf32>,
    return
  }
  func.func @transform_0(%arg0: i32) -> (i32, i32, i32) {
    %c0_i32 = arith.constant 0 : i32
    %c0_i32_0 = arith.constant 0 : i32
    %c0_i32_1 = arith.constant 0 : i32
    return %arg0, %c0_i32, %c0_i32_0 : i32, i32, i32
  }
  func.func @transform_1(%arg0: i32) -> (i32, i32) {
    %c0_i32 = arith.constant 0 : i32
    %c0_i32_0 = arith.constant 0 : i32
    %c0_i32_1 = arith.constant 0 : i32
    return %c0_i32, %c0_i32_0 : i32, i32
  }
  func.func @transform_2(%arg0: i32) -> (i32, i32) {
    %c0_i32 = arith.constant 0 : i32
    %c0_i32_0 = arith.constant 0 : i32
    %c0_i32_1 = arith.constant 0 : i32
    return %c0_i32, %c0_i32_0 : i32, i32
  }
  func.func @transform_3(%arg0: i32) -> (i32, i32) {
    %c0_i32 = arith.constant 0 : i32
    %c0_i32_0 = arith.constant 0 : i32
    %c0_i32_1 = arith.constant 0 : i32
    return %c0_i32, %c0_i32_0 : i32, i32
  }
  func.func @transform_4(%arg0: i32) -> (i32, i32, i32) {
    %c0_i32 = arith.constant 0 : i32
    %c0_i32_0 = arith.constant 0 : i32
    %c0_i32_1 = arith.constant 0 : i32
    return %arg0, %c0_i32, %c0_i32_0 : i32, i32, i32
  }
  func.func @transform_5(%arg0: i32) -> (i32, i32, i32) {
    %c0_i32 = arith.constant 0 : i32
    %c0_i32_0 = arith.constant 0 : i32
    %c0_i32_1 = arith.constant 0 : i32
    return %arg0, %c0_i32, %c0_i32_0 : i32, i32, i32
  }
  func.func @transform_6(%arg0: i32) -> (i32, i32, i32) {
    %c0_i32 = arith.constant 0 : i32
    %c0_i32_0 = arith.constant 0 : i32
    %c0_i32_1 = arith.constant 0 : i32
    return %arg0, %c0_i32, %c0_i32_0 : i32, i32, i32
  }
}

</mosaic_0001>

<llo_original>
// kernel: tpu_custom_call.1
$region0: #{tpu_custom_call.1}
  #allocation0 [shape = 'u32[]', space=smem, size = 0x4, offset = 0x4, fixed_abs, tag = 'smem constant byte address 0x4 - core index']
  #allocation1 [shape = 'u32[144,128]{1,0:T(1,128)}', space=vmem, size = 0x12000, scoped, tag = 'internal scratch']
  #allocation2 [shape = 'f32[64,128]{1,0:T(8,128)}', space=vmem, size = 0x8000, scoped, tag = 'scratch operand']
  %s0 = inlined_call_operand.vmem [shape: f32[2,64,32], index: 0, kind: input, shape index: {}]
  %s1 = inlined_call_operand.vmem [shape: f32[32,128], index: 1, kind: input, shape index: {}]
  %s2 = inlined_call_operand.vmem [shape: f32[1,128], index: 2, kind: input, shape index: {}]
  %s3 = inlined_call_operand.vmem [shape: f32[32,128], index: 3, kind: input, shape index: {}]
  %s4 = inlined_call_operand.hbm [shape: f32[2,8,32], index: 4, kind: output, shape index: {0}]
  %s5 = inlined_call_operand.hbm [shape: f32[2,8,32], index: 5, kind: output, shape index: {1}]
  %s6 = inlined_call_operand.vmem [shape: f32[2,64,32], index: 6, kind: output, shape index: {2}]
  %7 = xla_tuple %s4, %s5, %s6
  %s8 = sld [smem:[#allocation0]]
  $region65: #{tpu_custom_call.1} parent=0
    _
  %s10 = ssub.s32 1, %s8
  %s11 = scalar_select 0, %s10, %s8
  $region1: #{tpu_custom_call.1} parent=0
    #allocation3 [shape = 'u8[8192]{0}', space=vmem, size = 0x2000, scoped, tag = 'output window, operand 0']
    #allocation4 [shape = 's32[2]{0}', space=sflag, size = 0x8, scoped, tag = 'scoped memory for tpu_custom_call.1']
    #allocation5 [shape = 'u8[8192]{0}', space=vmem, size = 0x2000, scoped, tag = 'output window, operand 1']
    #allocation6 [shape = 's32[2]{0}', space=sflag, size = 0x8, scoped, tag = 'scoped memory for tpu_custom_call.1']
    %12 = vsyncpa [#allocation4], 0
    %s13 = scalar_lea.sflag [#allocation4], 1
    %14 = vsyncpa %s13, 0
    %15 = vsyncpa [#allocation6], 0
    %s16 = scalar_lea.sflag [#allocation6], 1
    %17 = vsyncpa %s16, 0
    loop: start=0, step=1, limit=4
    $region2: #{tpu_custom_call.1} parent=1 // loop_pre_header
      _
    $region3: #{tpu_custom_call.1} parent=1 // loop_header
      %s19 = sphi 0, %s23
      %p20 = scmp.ge.s32.totalorder %s19, 4
      %s29 = sphi 0, %s31
      %s32 = sphi 0, %s29
      %s33 = sphi 0, %s32
      %s49 = sphi 0, %s33
      %s53 = sphi 0, %s53
      %s55 = sphi 0, %s53
      %s56 = sphi 0, %s55
      %s70 = sphi 0, %s56
      %s74 = sphi 0, %s74
      %s76 = sphi 0, %s74
      %s77 = sphi 0, %s76
      %s91 = sphi 0, %s77
      %s95 = sphi 0, %s95
      %s97 = sphi 0, %s95
      %s98 = sphi 0, %s97
      %s112 = sphi 0, %s98
      %s118 = sphi 0, %s120
      %s121 = sphi 0, %s118
      %s122 = sphi 0, %s121
      %s138 = sphi 0, %s122
      %s144 = sphi 0, %s146
      %s147 = sphi 0, %s144
      %s148 = sphi 0, %s147
      %s164 = sphi 0, %s148
      %s170 = sphi 0, %s172
      %s173 = sphi 0, %s170
      %s174 = sphi 0, %s173
      %s190 = sphi 0, %s174
    $region4: #{tpu_custom_call.1} parent=1 // loop_header_branch
      %22 = sbr.rel (%p20) target = $region8
    $region5: #{tpu_custom_call.1} parent=1 // loop_body
      %s24 = ssub.s32 %s19, 1
      %s25 = ssub.s32 %s19, 2
      %s26 = sadd.s32 %s19, 1
      %s27 = ssub.s32 %s19, %s26
      %p28 = scmp.eq.s32.totalorder %s27, 0
      %s30 = sadd.s32 %s29, 1
      %s31 = scalar_select %p28, %s29, %s30
      %p34 = pneg %p28
      %p35 = scmp.eq.s32.totalorder %s19, 1
      %p36 = por %p34, %p35
      %p37 = scmp.ne.s32.totalorder %s29, %s32
      %p38 = scmp.eq.s32.totalorder %s19, 0
      %p39 = por %p37, %p38
      %p40 = scmp.ne.s32.totalorder %s29, %s32
      %p41 = scmp.eq.s32.totalorder %s24, 1
      %p42 = por %p40, %p41
      %p43 = scmp.ne.s32.totalorder %s32, %s33
      %p44 = scmp.eq.s32.totalorder %s24, 0
      %p45 = por %p43, %p44
      %p46 = scmp.ne.s32.totalorder %s32, %s33
      %p47 = scmp.eq.s32.totalorder %s25, 1
      %p48 = por %p46, %p47
      %p50 = scmp.ne.s32.totalorder %s33, %s49
      %p51 = scmp.eq.s32.totalorder %s25, 0
      %p52 = por %p50, %p51
      %s54 = sadd.s32 %s53, 1
      %p57 = scmp.eq.s32.totalorder %s19, 1
      %p58 = scmp.ne.s32.totalorder %s53, %s55
      %p59 = scmp.eq.s32.totalorder %s19, 0
      %p60 = por %p58, %p59
      %p61 = scmp.ne.s32.totalorder %s53, %s55
      %p62 = scmp.eq.s32.totalorder %s24, 1
      %p63 = por %p61, %p62
      %p64 = scmp.ne.s32.totalorder %s55, %s56
      %p65 = scmp.eq.s32.totalorder %s24, 0
      %p66 = por %p64, %p65
      %p67 = scmp.ne.s32.totalorder %s55, %s56
      %p68 = scmp.eq.s32.totalorder %s25, 1
      %p69 = por %p67, %p68
      %p71 = scmp.ne.s32.totalorder %s56, %s70
      %p72 = scmp.eq.s32.totalorder %s25, 0
      %p73 = por %p71, %p72
      %s75 = sadd.s32 %s74, 1
      %p78 = scmp.eq.s32.totalorder %s19, 1
      %p79 = scmp.ne.s32.totalorder %s74, %s76
      %p80 = scmp.eq.s32.totalorder %s19, 0
      %p81 = por %p79, %p80
      %p82 = scmp.ne.s32.totalorder %s74, %s76
      %p83 = scmp.eq.s32.totalorder %s24, 1
      %p84 = por %p82, %p83
      %p85 = scmp.ne.s32.totalorder %s76, %s77
      %p86 = scmp.eq.s32.totalorder %s24, 0
      %p87 = por %p85, %p86
      %p88 = scmp.ne.s32.totalorder %s76, %s77
      %p89 = scmp.eq.s32.totalorder %s25, 1
      %p90 = por %p88, %p89
      %p92 = scmp.ne.s32.totalorder %s77, %s91
      %p93 = scmp.eq.s32.totalorder %s25, 0
      %p94 = por %p92, %p93
      %s96 = sadd.s32 %s95, 1
      %p99 = scmp.eq.s32.totalorder %s19, 1
      %p100 = scmp.ne.s32.totalorder %s95, %s97
      %p101 = scmp.eq.s32.totalorder %s19, 0
      %p102 = por %p100, %p101
      %p103 = scmp.ne.s32.totalorder %s95, %s97
      %p104 = scmp.eq.s32.totalorder %s24, 1
      %p105 = por %p103, %p104
      %p106 = scmp.ne.s32.totalorder %s97, %s98
      %p107 = scmp.eq.s32.totalorder %s24, 0
      %p108 = por %p106, %p107
      %p109 = scmp.ne.s32.totalorder %s97, %s98
      %p110 = scmp.eq.s32.totalorder %s25, 1
      %p111 = por %p109, %p110
      %p113 = scmp.ne.s32.totalorder %s98, %s112
      %p114 = scmp.eq.s32.totalorder %s25, 0
      %p115 = por %p113, %p114
      %s116 = ssub.s32 %s19, %s26
      %p117 = scmp.eq.s32.totalorder %s116, 0
      %s119 = sadd.s32 %s118, 1
      %s120 = scalar_select %p117, %s118, %s119
      %p123 = pneg %p117
      %p124 = scmp.eq.s32.totalorder %s19, 1
      %p125 = por %p123, %p124
      %p126 = scmp.ne.s32.totalorder %s118, %s121
      %p127 = scmp.eq.s32.totalorder %s19, 0
      %p128 = por %p126, %p127
      %p129 = scmp.ne.s32.totalorder %s118, %s121
      %p130 = scmp.eq.s32.totalorder %s24, 1
      %p131 = por %p129, %p130
      %p132 = scmp.ne.s32.totalorder %s121, %s122
      %p133 = scmp.eq.s32.totalorder %s24, 0
      %p134 = por %p132, %p133
      %p135 = scmp.ne.s32.totalorder %s121, %s122
      %p136 = scmp.eq.s32.totalorder %s25, 1
      %p137 = por %p135, %p136
      %p139 = scmp.ne.s32.totalorder %s122, %s138
      %p140 = scmp.eq.s32.totalorder %s25, 0
      %p141 = por %p139, %p140
      %s142 = ssub.s32 %s19, %s26
      %p143 = scmp.eq.s32.totalorder %s142, 0
      %s145 = sadd.s32 %s144, 1
      %s146 = scalar_select %p143, %s144, %s145
      %p149 = pneg %p143
      %p150 = scmp.eq.s32.totalorder %s19, 1
      %p151 = por %p149, %p150
      %p152 = scmp.ne.s32.totalorder %s144, %s147
      %p153 = scmp.eq.s32.totalorder %s19, 0
      %p154 = por %p152, %p153
      %p155 = scmp.ne.s32.totalorder %s144, %s147
      %p156 = scmp.eq.s32.totalorder %s24, 1
      %p157 = por %p155, %p156
      %p158 = scmp.ne.s32.totalorder %s147, %s148
      %p159 = scmp.eq.s32.totalorder %s24, 0
      %p160 = por %p158, %p159
      %p161 = scmp.ne.s32.totalorder %s147, %s148
      %p162 = scmp.eq.s32.totalorder %s25, 1
      %p163 = por %p161, %p162
      %p165 = scmp.ne.s32.totalorder %s148, %s164
      %p166 = scmp.eq.s32.totalorder %s25, 0
      %p167 = por %p165, %p166
      %s168 = ssub.s32 %s19, %s26
      %p169 = scmp.eq.s32.totalorder %s168, 0
      %s171 = sadd.s32 %s170, 1
      %s172 = scalar_select %p169, %s170, %s171
      %p175 = pneg %p169
      %p176 = scmp.eq.s32.totalorder %s19, 1
      %p177 = por %p175, %p176
      %p178 = scmp.ne.s32.totalorder %s170, %s173
      %p179 = scmp.eq.s32.totalorder %s19, 0
      %p180 = por %p178, %p179
      %p181 = scmp.ne.s32.totalorder %s170, %s173
      %p182 = scmp.eq.s32.totalorder %s24, 1
      %p183 = por %p181, %p182
      %p184 = scmp.ne.s32.totalorder %s173, %s174
      %p185 = scmp.eq.s32.totalorder %s24, 0
      %p186 = por %p184, %p185
      %p187 = scmp.ne.s32.totalorder %s173, %s174
      %p188 = scmp.eq.s32.totalorder %s25, 1
      %p189 = por %p187, %p188
      %p191 = scmp.ne.s32.totalorder %s174, %s190
      %p192 = scmp.eq.s32.totalorder %s25, 0
      %p193 = por %p191, %p192
      %p194 = scmp.le.s32.totalorder 1, %s19
      %p195 = scmp.lt.s32.totalorder %s19, 3
      %p196 = pnand %p194, %p195
      %p197 = pneg %p196
      // Predicated region
      $region9: #{tpu_custom_call.1} parent=5 // pred_check
        _
      $region10: #{tpu_custom_call.1} parent=5 // pred_check_branch
        %199 = sbr.rel (%p196) target = $region12
      $region11: #{tpu_custom_call.1} parent=5 // pred_region
        %s200 = ssub.s32 %s19, 1
        // Predicated region
        $region13: #{tpu_custom_call.1} parent=11 // pred_check
          %p201 = pneg %p66
        $region14: #{tpu_custom_call.1} parent=11 // pred_check_branch
          %203 = sbr.rel (%p201) target = $region16
        $region15: #{tpu_custom_call.1} parent=11 // pred_region
          _
        $region16: #{tpu_custom_call.1} parent=11 // pred_fallthru
          _
        // Predicated region
        $region17: #{tpu_custom_call.1} parent=11 // pred_check
          %p204 = pneg %p87
        $region18: #{tpu_custom_call.1} parent=11 // pred_check_branch
          %206 = sbr.rel (%p204) target = $region20
        $region19: #{tpu_custom_call.1} parent=11 // pred_region
          _
        $region20: #{tpu_custom_call.1} parent=11 // pred_fallthru
          _
        // Predicated region
        $region21: #{tpu_custom_call.1} parent=11 // pred_check
          %p207 = pneg %p108
        $region22: #{tpu_custom_call.1} parent=11 // pred_check_branch
          %209 = sbr.rel (%p207) target = $region24
        $region23: #{tpu_custom_call.1} parent=11 // pred_region
          _
        $region24: #{tpu_custom_call.1} parent=11 // pred_fallthru
          _
      $region12: #{tpu_custom_call.1} parent=5 // pred_fallthru
        _
      %p210 = scmp.lt.s32.totalorder %s19, 2
      // Predicated region
      $region25: #{tpu_custom_call.1} parent=5 // pred_check
        %p211 = pneg %p210
      $region26: #{tpu_custom_call.1} parent=5 // pred_check_branch
        %213 = sbr.rel (%p211) target = $region28
      $region27: #{tpu_custom_call.1} parent=5 // pred_region
        // Predicated region
        $region29: #{tpu_custom_call.1} parent=27 // pred_check
          %p214 = pneg %p39
        $region30: #{tpu_custom_call.1} parent=27 // pred_check_branch
          %216 = sbr.rel (%p214) target = $region32
        $region31: #{tpu_custom_call.1} parent=27 // pred_region
          %p217 = scmp.lt.s32.totalorder %s19, 1
          %s218 = scalar_select %p217, %s19, 1
          %s219 = smul.addr %s218, 8
          %s220 = smul.addr %s219, 8
          %s221 = scalar_lea.vmem %s0, %s220
        $region32: #{tpu_custom_call.1} parent=27 // pred_fallthru
          _
      $region28: #{tpu_custom_call.1} parent=5 // pred_fallthru
        _
      %p222 = scmp.le.s32.totalorder 1, %s19
      %p223 = scmp.lt.s32.totalorder %s19, 3
      %p224 = pnand %p222, %p223
      %p225 = pneg %p224
      // Predicated region
      $region33: #{tpu_custom_call.1} parent=5 // pred_check
        _
      $region34: #{tpu_custom_call.1} parent=5 // pred_check_branch
        %227 = sbr.rel (%p224) target = $region36
      $region35: #{tpu_custom_call.1} parent=5 // pred_region
        %s228 = ssub.s32 %s19, 1
        %p229 = scmp.lt.s32.totalorder %s24, 1
        %s230 = scalar_select %p229, %s24, 1
        %s231 = smul.addr %s230, 8
        %s232 = smul.addr %s231, 8
        %s233 = scalar_lea.vmem %s0, %s232
        %p234 = pneg %p45
        %p235 = pneg %p42
        %p236 = pneg %p66
        %p237 = pneg %p63
        %p238 = pneg %p87
        %p239 = pneg %p84
        %p240 = pneg %p108
        %p241 = pneg %p105
        %p242 = pneg %p134
        %p243 = pneg %p131
        %s244 = sand.u32 %s121, 1
        %s245 = scalar_lea.sflag [#allocation4], %s244
        %s246 = sand.u32 %s121, 1
        %s247 = smul.addr %s246, 8
        %s248 = scalar_lea.vmem [#allocation3], %s247
        %p249 = pneg %p160
        %p250 = pneg %p157
        %s251 = sand.u32 %s147, 1
        %s252 = scalar_lea.sflag [#allocation6], %s251
        %s253 = sand.u32 %s147, 1
        %s254 = smul.addr %s253, 8
        %s255 = scalar_lea.vmem [#allocation5], %s254
        %p256 = pneg %p186
        %p257 = pneg %p183
        %p258 = scmp.lt.s32.totalorder %s24, 1
        %s259 = scalar_select %p258, %s24, 1
        %s260 = smul.addr %s259, 8
        %s261 = smul.addr %s260, 8
        %s262 = scalar_lea.vmem %s6, %s261
        %p263 = scmp.lt.s32.totalorder %s24, 1
        %s264 = scalar_select %p263, %s24, 1
        %s265 = smul.addr %s264, 8
        %s266 = smul.addr %s265, 8
        %s267 = scalar_lea.vmem %s0, %s266
        %p268 = scmp.lt.s32.totalorder %s24, 1
        %s269 = scalar_select %p268, %s24, 1
        %s270 = smul.addr %s269, 8
        %s271 = smul.addr %s270, 8
        %s272 = scalar_lea.vmem %s6, %s271
        %v273 = vld [vmem:[%s267] sm:$0xff]
        %v274 = vld [vmem:[%s267 + $0x8] sm:$0xff]
        %v275 = vld [vmem:[%s267 + $0x10] sm:$0xff]
        %v276 = vld [vmem:[%s267 + $0x18] sm:$0xff]
        %v277 = vld [vmem:[%s267 + $0x20] sm:$0xff]
        %v278 = vld [vmem:[%s267 + $0x28] sm:$0xff]
        %v279 = vld [vmem:[%s267 + $0x30] sm:$0xff]
        %v280 = vld [vmem:[%s267 + $0x38] sm:$0xff]
        %v281 = vld [vmem:[%s1] sm:$0xff]
        %v282 = vld [vmem:[%s1 + $0x8] sm:$0xff]
        %v283 = vld [vmem:[%s1 + $0x10] sm:$0xff]
        %v284 = vld [vmem:[%s1 + $0x18] sm:$0xff]
        %v285 = vld [vmem:[%s2] sm:$0x1]
        %v287 = vlaneseq
        %v288 = vshrl.u32 %v287, 7
        %v289 = vsub.s32 0, %v288
        %v290 = vrot.slane %v285, %v289
        %vm292 = vcmask 261120
        %v294 = vsel %vm292, %v273, 0
        %v297 = vsel %vm292, %v274, 0
        %v300 = vsel %vm292, %v275, 0
        %v303 = vsel %vm292, %v276, 0
        %v306 = vsel %vm292, %v277, 0
        %v309 = vsel %vm292, %v278, 0
        %v312 = vsel %vm292, %v279, 0
        %v315 = vsel %vm292, %v280, 0
        %317 = vmatprep.subr.mxu0 0.0
        %318 = vmatpush1.msra.mxu0 %v281
        %319 = vmatprep.subr.mxu0 0.0
        %320 = vmatpush1.msra.mxu0 %v282
        %321 = vmatprep.subr.mxu0 0.0
        %322 = vmatpush1.msra.mxu0 %v283
        %323 = vmatprep.subr.mxu0 0.0
        %324 = vmatpush1.msra.mxu0 %v284
        %325 = vmatprep.subr.mxu0 0.0
        %326 = vmatpush1.msra.mxu0 0.0
        %327 = vmatprep.subr.mxu0 0.0
        %328 = vmatpush1.msra.mxu0 0.0
        %329 = vmatprep.subr.mxu0 0.0
        %330 = vmatpush1.msra.mxu0 0.0
        %331 = vmatprep.subr.mxu0 0.0
        %332 = vmatpush1.msra.mxu0 0.0
        %333 = vmatprep.subr.mxu0 0.0
        %334 = vmatpush1.msra.mxu0 0.0
        %335 = vmatprep.subr.mxu0 0.0
        %336 = vmatpush1.msra.mxu0 0.0
        %337 = vmatprep.subr.mxu0 0.0
        %338 = vmatpush1.msra.mxu0 0.0
        %339 = vmatprep.subr.mxu0 0.0
        %340 = vmatpush1.msra.mxu0 0.0
        %341 = vmatprep.subr.mxu0 0.0
        %342 = vmatpush1.msra.mxu0 0.0
        %343 = vmatprep.subr.mxu0 0.0
        %344 = vmatpush1.msra.mxu0 0.0
        %345 = vmatprep.subr.mxu0 0.0
        %346 = vmatpush1.msra.mxu0 0.0
        %347 = vmatprep.subr.mxu0 0.0
        %348 = vmatpush1.msra.mxu0 0.0
        %349 = vmatprep.subr.mxu0 0.0
        %350 = vmatpush1.msra.mxu0 0.0
        %351 = vmatprep.subr.mxu0 0.0
        %352 = vmatpush1.msra.mxu0 0.0
        %353 = vmatprep.subr.mxu0 0.0
        %354 = vmatpush1.msra.mxu0 0.0
        %355 = vmatprep.subr.mxu0 0.0
        %356 = vmatpush1.msra.mxu0 0.0
        %357 = vmatprep.subr.mxu0 0.0
        %358 = vmatpush1.msra.mxu0 0.0
        %359 = vmatprep.subr.mxu0 0.0
        %360 = vmatpush1.msra.mxu0 0.0
        %361 = vmatprep.subr.mxu0 0.0
        %362 = vmatpush1.msra.mxu0 0.0
        %363 = vmatprep.subr.mxu0 0.0
        %364 = vmatpush1.msra.mxu0 0.0
        %365 = vmatprep.subr.mxu0 0.0
        %366 = vmatpush1.msra.mxu0 0.0
        %367 = vmatprep.subr.mxu0 0.0
        %368 = vmatpush1.msra.mxu0 0.0
        %369 = vmatprep.subr.mxu0 0.0
        %370 = vmatpush1.msra.mxu0 0.0
        %371 = vmatprep.subr.mxu0 0.0
        %372 = vmatpush1.msra.mxu0 0.0
        %373 = vmatprep.subr.mxu0 0.0
        %374 = vmatpush1.msra.mxu0 0.0
        %375 = vmatprep.subr.mxu0 0.0
        %376 = vmatpush1.msra.mxu0 0.0
        %377 = vmatprep.subr.mxu0 0.0
        %378 = vmatpush1.msra.mxu0 0.0
        %379 = vmatprep.subr.mxu0 0.0
        %380 = vmatpush1.msra.mxu0 0.0
        %381 = vmatprep.mubr.f32.mxu0 0.0
        %382 = vmatmul.mubr.f32.gmra.mrb[0].mxu0 %v294
        %v383 = vpop.f32.mrb[0].mxu0
        %v384 = vadd.f32 %v290, %v383
        %v385 = vpop.f32.mrb[0].mxu0
        %386 = vmatprep.mubr.f32.mxu0 0.0
        %387 = vmatmul.mubr.f32.gmra.mrb[0].mxu0 %v297
        %v388 = vpop.f32.mrb[0].mxu0
        %v389 = vadd.f32 %v290, %v388
        %v390 = vpop.f32.mrb[0].mxu0
        %391 = vmatprep.mubr.f32.mxu0 0.0
        %392 = vmatmul.mubr.f32.gmra.mrb[0].mxu0 %v300
        %v393 = vpop.f32.mrb[0].mxu0
        %v394 = vadd.f32 %v290, %v393
        %v395 = vpop.f32.mrb[0].mxu0
        %396 = vmatprep.mubr.f32.mxu0 0.0
        %397 = vmatmul.mubr.f32.gmra.mrb[0].mxu0 %v303
        %v398 = vpop.f32.mrb[0].mxu0
        %v399 = vadd.f32 %v290, %v398
        %v400 = vpop.f32.mrb[0].mxu0
        %401 = vmatprep.mubr.f32.mxu0 0.0
        %402 = vmatmul.mubr.f32.gmra.mrb[0].mxu0 %v306
        %v403 = vpop.f32.mrb[0].mxu0
        %v404 = vadd.f32 %v290, %v403
        %v405 = vpop.f32.mrb[0].mxu0
        %406 = vmatprep.mubr.f32.mxu0 0.0
        %407 = vmatmul.mubr.f32.gmra.mrb[0].mxu0 %v309
        %v408 = vpop.f32.mrb[0].mxu0
        %v409 = vadd.f32 %v290, %v408
        %v410 = vpop.f32.mrb[0].mxu0
        %411 = vmatprep.mubr.f32.mxu0 0.0
        %412 = vmatmul.mubr.f32.gmra.mrb[0].mxu0 %v312
        %v413 = vpop.f32.mrb[0].mxu0
        %v414 = vadd.f32 %v290, %v413
        %v415 = vpop.f32.mrb[0].mxu0
        %416 = vmatprep.mubr.f32.mxu0 0.0
        %417 = vmatmul.mubr.f32.gmra.mrb[0].mxu0 %v315
        %v418 = vpop.f32.mrb[0].mxu0
        %v419 = vadd.f32 %v290, %v418
        %v420 = vpop.f32.mrb[0].mxu0
        %421 = vdwg.mxu0
        %422 = vst [vmem:[#allocation2] sm:$0xff] %v384
        %423 = vst [vmem:[#allocation2 + $0x8] sm:$0xff] %v389
        %424 = vst [vmem:[#allocation2 + $0x10] sm:$0xff] %v394
        %425 = vst [vmem:[#allocation2 + $0x18] sm:$0xff] %v399
        %426 = vst [vmem:[#allocation2 + $0x20] sm:$0xff] %v404
        %427 = vst [vmem:[#allocation2 + $0x28] sm:$0xff] %v409
        %428 = vst [vmem:[#allocation2 + $0x30] sm:$0xff] %v414
        %429 = vst [vmem:[#allocation2 + $0x38] sm:$0xff] %v419
        %v430 = vld [vmem:[%s3] sm:$0xff]
        %v431 = vld [vmem:[%s3 + $0x8] sm:$0xff]
        %v432 = vld [vmem:[%s3 + $0x10] sm:$0xff]
        %v433 = vld [vmem:[%s3 + $0x18] sm:$0xff]
        %v434 = vld [vmem:[#allocation2] sm:$0xff]
        %v436 = vsel %vm292, 0.0, 0
        %438 = vmatprep.subr.mxu0 0.0
        %439 = vmatpush1.msra.mxu0 %v430
        %440 = vmatprep.subr.mxu0 0.0
        %441 = vmatpush1.msra.mxu0 %v431
        %442 = vmatprep.subr.mxu0 0.0
        %443 = vmatpush1.msra.mxu0 %v432
        %444 = vmatprep.subr.mxu0 0.0
        %445 = vmatpush1.msra.mxu0 %v433
        %446 = vmatprep.subr.mxu0 0.0
        %447 = vmatpush1.msra.mxu0 0.0
        %448 = vmatprep.subr.mxu0 0.0
        %449 = vmatpush1.msra.mxu0 0.0
        %450 = vmatprep.subr.mxu0 0.0
        %451 = vmatpush1.msra.mxu0 0.0
        %452 = vmatprep.subr.mxu0 0.0
        %453 = vmatpush1.msra.mxu0 0.0
        %454 = vmatprep.subr.mxu0 0.0
        %455 = vmatpush1.msra.mxu0 0.0
        %456 = vmatprep.subr.mxu0 0.0
        %457 = vmatpush1.msra.mxu0 0.0
        %458 = vmatprep.subr.mxu0 0.0
        %459 = vmatpush1.msra.mxu0 0.0
        %460 = vmatprep.subr.mxu0 0.0
        %461 = vmatpush1.msra.mxu0 0.0
        %462 = vmatprep.subr.mxu0 0.0
        %463 = vmatpush1.msra.mxu0 0.0
        %464 = vmatprep.subr.mxu0 0.0
        %465 = vmatpush1.msra.mxu0 0.0
        %466 = vmatprep.subr.mxu0 0.0
        %467 = vmatpush1.msra.mxu0 0.0
        %468 = vmatprep.subr.mxu0 0.0
        %469 = vmatpush1.msra.mxu0 0.0
        %470 = vmatprep.subr.mxu0 0.0
        %471 = vmatpush1.msra.mxu0 0.0
        %472 = vmatprep.subr.mxu0 0.0
        %473 = vmatpush1.msra.mxu0 0.0
        %474 = vmatprep.subr.mxu0 0.0
        %475 = vmatpush1.msra.mxu0 0.0
        %476 = vmatprep.subr.mxu0 0.0
        %477 = vmatpush1.msra.mxu0 0.0
        %478 = vmatprep.subr.mxu0 0.0
        %479 = vmatpush1.msra.mxu0 0.0
        %480 = vmatprep.subr.mxu0 0.0
        %481 = vmatpush1.msra.mxu0 0.0
        %482 = vmatprep.subr.mxu0 0.0
        %483 = vmatpush1.msra.mxu0 0.0
        %484 = vmatprep.subr.mxu0 0.0
        %485 = vmatpush1.msra.mxu0 0.0
        %486 = vmatprep.subr.mxu0 0.0
        %487 = vmatpush1.msra.mxu0 0.0
        %488 = vmatprep.subr.mxu0 0.0
        %489 = vmatpush1.msra.mxu0 0.0
        %490 = vmatprep.subr.mxu0 0.0
        %491 = vmatpush1.msra.mxu0 0.0
        %492 = vmatprep.subr.mxu0 0.0
        %493 = vmatpush1.msra.mxu0 0.0
        %494 = vmatprep.subr.mxu0 0.0
        %495 = vmatpush1.msra.mxu0 0.0
        %496 = vmatprep.subr.mxu0 0.0
        %497 = vmatpush1.msra.mxu0 0.0
        %498 = vmatprep.subr.mxu0 0.0
        %499 = vmatpush1.msra.mxu0 0.0
        %500 = vmatprep.subr.mxu0 0.0
        %501 = vmatpush1.msra.mxu0 0.0
        %502 = vmatprep.mubr.f32.mxu0 0.0
        %503 = vmatmul.mubr.f32.gmra.mrb[0].mxu0 %v436
        %v504 = vpop.f32.mrb[0].mxu0
        %v505 = vadd.f32 0.0, %v504
        %v506 = vpop.f32.mrb[0].mxu0
        %507 = vdwg.mxu0
        %v508 = vadd.f32 %v434, %v505
        %v509 = vxor.u32 %v508, 2147483648
        %v510 = vmul.f32 %v509, 1.442695
        %v511 = vpow.pop %v510
        %v512 = vadd.f32 %v511, 1.0
        %v513 = vrcp.pop %v512
        %v514 = vmul.f32 1.0, %v513
        %v515 = vtanh.pop %v508
        %517 = vrot.lane.b32.xlu0 %v515, 64
        %v518 = vpop.permute.xlu0 %517
        %v520 = vmul.f32 %v514, %v518
        %v521 = vmul.f32 %v514, 0.0
        %523 = vrot.lane.b32.xlu0 %v521, 32
        %v524 = vpop.permute.xlu0 %523
        %v526 = vadd.f32 %v520, %v524
        %v527 = vtanh.pop %v526
        %529 = vrot.lane.b32.xlu0 %v527, 32
        %v530 = vpop.permute.xlu0 %529
        %v532 = vmul.f32 %v514, %v530
        %534 = vrot.lane.b32.xlu0 %v532, 96
        %v535 = vpop.permute.xlu0 %534
        %537 = vst.msk [vmem:[%s272] sm:$0xff] %vm292, %v535
        %s538 = scalar_lea.vmem [#allocation2], 8
        %v539 = vld [vmem:[%s538] sm:$0xff]
        %v540 = vsel %vm292, %v535, 0
        %542 = vmatprep.subr.mxu0 0.0
        %543 = vmatpush1.msra.mxu0 %v430
        %544 = vmatprep.subr.mxu0 0.0
        %545 = vmatpush1.msra.mxu0 %v431
        %546 = vmatprep.subr.mxu0 0.0
        %547 = vmatpush1.msra.mxu0 %v432
        %548 = vmatprep.subr.mxu0 0.0
        %549 = vmatpush1.msra.mxu0 %v433
        %550 = vmatprep.subr.mxu0 0.0
        %551 = vmatpush1.msra.mxu0 0.0
        %552 = vmatprep.subr.mxu0 0.0
        %553 = vmatpush1.msra.mxu0 0.0
        %554 = vmatprep.subr.mxu0 0.0
        %555 = vmatpush1.msra.mxu0 0.0
        %556 = vmatprep.subr.mxu0 0.0
        %557 = vmatpush1.msra.mxu0 0.0
        %558 = vmatprep.subr.mxu0 0.0
        %559 = vmatpush1.msra.mxu0 0.0
        %560 = vmatprep.subr.mxu0 0.0
        %561 = vmatpush1.msra.mxu0 0.0
        %562 = vmatprep.subr.mxu0 0.0
        %563 = vmatpush1.msra.mxu0 0.0
        %564 = vmatprep.subr.mxu0 0.0
        %565 = vmatpush1.msra.mxu0 0.0
        %566 = vmatprep.subr.mxu0 0.0
        %567 = vmatpush1.msra.mxu0 0.0
        %568 = vmatprep.subr.mxu0 0.0
        %569 = vmatpush1.msra.mxu0 0.0
        %570 = vmatprep.subr.mxu0 0.0
        %571 = vmatpush1.msra.mxu0 0.0
        %572 = vmatprep.subr.mxu0 0.0
        %573 = vmatpush1.msra.mxu0 0.0
        %574 = vmatprep.subr.mxu0 0.0
        %575 = vmatpush1.msra.mxu0 0.0
        %576 = vmatprep.subr.mxu0 0.0
        %577 = vmatpush1.msra.mxu0 0.0
        %578 = vmatprep.subr.mxu0 0.0
        %579 = vmatpush1.msra.mxu0 0.0
        %580 = vmatprep.subr.mxu0 0.0
        %581 = vmatpush1.msra.mxu0 0.0
        %582 = vmatprep.subr.mxu0 0.0
        %583 = vmatpush1.msra.mxu0 0.0
        %584 = vmatprep.subr.mxu0 0.0
        %585 = vmatpush1.msra.mxu0 0.0
        %586 = vmatprep.subr.mxu0 0.0
        %587 = vmatpush1.msra.mxu0 0.0
        %588 = vmatprep.subr.mxu0 0.0
        %589 = vmatpush1.msra.mxu0 0.0
        %590 = vmatprep.subr.mxu0 0.0
        %591 = vmatpush1.msra.mxu0 0.0
        %592 = vmatprep.subr.mxu0 0.0
        %593 = vmatpush1.msra.mxu0 0.0
        %594 = vmatprep.subr.mxu0 0.0
        %595 = vmatpush1.msra.mxu0 0.0
        %596 = vmatprep.subr.mxu0 0.0
        %597 = vmatpush1.msra.mxu0 0.0
        %598 = vmatprep.subr.mxu0 0.0
        %599 = vmatpush1.msra.mxu0 0.0
        %600 = vmatprep.subr.mxu0 0.0
        %601 = vmatpush1.msra.mxu0 0.0
        %602 = vmatprep.subr.mxu0 0.0
        %603 = vmatpush1.msra.mxu0 0.0
        %604 = vmatprep.subr.mxu0 0.0
        %605 = vmatpush1.msra.mxu0 0.0
        %606 = vmatprep.mubr.f32.mxu0 0.0
        %607 = vmatmul.mubr.f32.gmra.mrb[0].mxu0 %v540
        %v608 = vpop.f32.mrb[0].mxu0
        %v609 = vadd.f32 0.0, %v608
        %v610 = vpop.f32.mrb[0].mxu0
        %611 = vdwg.mxu0
        %v612 = vadd.f32 %v539, %v609
        %v613 = vxor.u32 %v612, 2147483648
        %v614 = vmul.f32 %v613, 1.442695
        %v615 = vpow.pop %v614
        %v616 = vadd.f32 %v615, 1.0
        %v617 = vrcp.pop %v616
        %v618 = vmul.f32 1.0, %v617
        %v619 = vtanh.pop %v612
        %621 = vrot.lane.b32.xlu0 %v619, 64
        %v622 = vpop.permute.xlu0 %621
        %v624 = vmul.f32 %v618, %v622
        %626 = vrot.lane.b32.xlu0 %v526, 96
        %v627 = vpop.permute.xlu0 %626
        %v629 = vmul.f32 %v618, %v627
        %631 = vrot.lane.b32.xlu0 %v629, 32
        %v632 = vpop.permute.xlu0 %631
        %v634 = vadd.f32 %v624, %v632
        %v635 = vtanh.pop %v634
        %637 = vrot.lane.b32.xlu0 %v635, 32
        %v638 = vpop.permute.xlu0 %637
        %v640 = vmul.f32 %v618, %v638
        %642 = vrot.lane.b32.xlu0 %v640, 96
        %v643 = vpop.permute.xlu0 %642
        %s645 = scalar_lea.vmem %s272, 8
        %646 = vst.msk [vmem:[%s645] sm:$0xff] %vm292, %v643
        %s647 = scalar_lea.vmem [#allocation2], 16
        %v648 = vld [vmem:[%s647] sm:$0xff]
        %v649 = vsel %vm292, %v643, 0
        %651 = vmatprep.subr.mxu0 0.0
        %652 = vmatpush1.msra.mxu0 %v430
        %653 = vmatprep.subr.mxu0 0.0
        %654 = vmatpush1.msra.mxu0 %v431
        %655 = vmatprep.subr.mxu0 0.0
        %656 = vmatpush1.msra.mxu0 %v432
        %657 = vmatprep.subr.mxu0 0.0
        %658 = vmatpush1.msra.mxu0 %v433
        %659 = vmatprep.subr.mxu0 0.0
        %660 = vmatpush1.msra.mxu0 0.0
        %661 = vmatprep.subr.mxu0 0.0
        %662 = vmatpush1.msra.mxu0 0.0
        %663 = vmatprep.subr.mxu0 0.0
        %664 = vmatpush1.msra.mxu0 0.0
        %665 = vmatprep.subr.mxu0 0.0
        %666 = vmatpush1.msra.mxu0 0.0
        %667 = vmatprep.subr.mxu0 0.0
        %668 = vmatpush1.msra.mxu0 0.0
        %669 = vmatprep.subr.mxu0 0.0
        %670 = vmatpush1.msra.mxu0 0.0
        %671 = vmatprep.subr.mxu0 0.0
        %672 = vmatpush1.msra.mxu0 0.0
        %673 = vmatprep.subr.mxu0 0.0
        %674 = vmatpush1.msra.mxu0 0.0
        %675 = vmatprep.subr.mxu0 0.0
        %676 = vmatpush1.msra.mxu0 0.0
        %677 = vmatprep.subr.mxu0 0.0
        %678 = vmatpush1.msra.mxu0 0.0
        %679 = vmatprep.subr.mxu0 0.0
        %680 = vmatpush1.msra.mxu0 0.0
        %681 = vmatprep.subr.mxu0 0.0
        %682 = vmatpush1.msra.mxu0 0.0
        %683 = vmatprep.subr.mxu0 0.0
        %684 = vmatpush1.msra.mxu0 0.0
        %685 = vmatprep.subr.mxu0 0.0
        %686 = vmatpush1.msra.mxu0 0.0
        %687 = vmatprep.subr.mxu0 0.0
        %688 = vmatpush1.msra.mxu0 0.0
        %689 = vmatprep.subr.mxu0 0.0
        %690 = vmatpush1.msra.mxu0 0.0
        %691 = vmatprep.subr.mxu0 0.0
        %692 = vmatpush1.msra.mxu0 0.0
        %693 = vmatprep.subr.mxu0 0.0
        %694 = vmatpush1.msra.mxu0 0.0
        %695 = vmatprep.subr.mxu0 0.0
        %696 = vmatpush1.msra.mxu0 0.0
        %697 = vmatprep.subr.mxu0 0.0
        %698 = vmatpush1.msra.mxu0 0.0
        %699 = vmatprep.subr.mxu0 0.0
        %700 = vmatpush1.msra.mxu0 0.0
        %701 = vmatprep.subr.mxu0 0.0
        %702 = vmatpush1.msra.mxu0 0.0
        %703 = vmatprep.subr.mxu0 0.0
        %704 = vmatpush1.msra.mxu0 0.0
        %705 = vmatprep.subr.mxu0 0.0
        %706 = vmatpush1.msra.mxu0 0.0
        %707 = vmatprep.subr.mxu0 0.0
        %708 = vmatpush1.msra.mxu0 0.0
        %709 = vmatprep.subr.mxu0 0.0
        %710 = vmatpush1.msra.mxu0 0.0
        %711 = vmatprep.subr.mxu0 0.0
        %712 = vmatpush1.msra.mxu0 0.0
        %713 = vmatprep.subr.mxu0 0.0
        %714 = vmatpush1.msra.mxu0 0.0
        %715 = vmatprep.mubr.f32.mxu0 0.0
        %716 = vmatmul.mubr.f32.gmra.mrb[0].mxu0 %v649
        %v717 = vpop.f32.mrb[0].mxu0
        %v718 = vadd.f32 0.0, %v717
        %v719 = vpop.f32.mrb[0].mxu0
        %720 = vdwg.mxu0
        %v721 = vadd.f32 %v648, %v718
        %v722 = vxor.u32 %v721, 2147483648
        %v723 = vmul.f32 %v722, 1.442695
        %v724 = vpow.pop %v723
        %v725 = vadd.f32 %v724, 1.0
        %v726 = vrcp.pop %v725
        %v727 = vmul.f32 1.0, %v726
        %v728 = vtanh.pop %v721
        %730 = vrot.lane.b32.xlu0 %v728, 64
        %v731 = vpop.permute.xlu0 %730
        %v733 = vmul.f32 %v727, %v731
        %735 = vrot.lane.b32.xlu0 %v634, 96
        %v736 = vpop.permute.xlu0 %735
        %v738 = vmul.f32 %v727, %v736
        %740 = vrot.lane.b32.xlu0 %v738, 32
        %v741 = vpop.permute.xlu0 %740
        %v743 = vadd.f32 %v733, %v741
        %v744 = vtanh.pop %v743
        %746 = vrot.lane.b32.xlu0 %v744, 32
        %v747 = vpop.permute.xlu0 %746
        %v749 = vmul.f32 %v727, %v747
        %751 = vrot.lane.b32.xlu0 %v749, 96
        %v752 = vpop.permute.xlu0 %751
        %s754 = scalar_lea.vmem %s272, 16
        %755 = vst.msk [vmem:[%s754] sm:$0xff] %vm292, %v752
        %s756 = scalar_lea.vmem [#allocation2], 24
        %v757 = vld [vmem:[%s756] sm:$0xff]
        %v758 = vsel %vm292, %v752, 0
        %760 = vmatprep.subr.mxu0 0.0
        %761 = vmatpush1.msra.mxu0 %v430
        %762 = vmatprep.subr.mxu0 0.0
        %763 = vmatpush1.msra.mxu0 %v431
        %764 = vmatprep.subr.mxu0 0.0
        %765 = vmatpush1.msra.mxu0 %v432
        %766 = vmatprep.subr.mxu0 0.0
        %767 = vmatpush1.msra.mxu0 %v433
        %768 = vmatprep.subr.mxu0 0.0
        %769 = vmatpush1.msra.mxu0 0.0
        %770 = vmatprep.subr.mxu0 0.0
        %771 = vmatpush1.msra.mxu0 0.0
        %772 = vmatprep.subr.mxu0 0.0
        %773 = vmatpush1.msra.mxu0 0.0
        %774 = vmatprep.subr.mxu0 0.0
        %775 = vmatpush1.msra.mxu0 0.0
        %776 = vmatprep.subr.mxu0 0.0
        %777 = vmatpush1.msra.mxu0 0.0
        %778 = vmatprep.subr.mxu0 0.0
        %779 = vmatpush1.msra.mxu0 0.0
        %780 = vmatprep.subr.mxu0 0.0
        %781 = vmatpush1.msra.mxu0 0.0
        %782 = vmatprep.subr.mxu0 0.0
        %783 = vmatpush1.msra.mxu0 0.0
        %784 = vmatprep.subr.mxu0 0.0
        %785 = vmatpush1.msra.mxu0 0.0
        %786 = vmatprep.subr.mxu0 0.0
        %787 = vmatpush1.msra.mxu0 0.0
        %788 = vmatprep.subr.mxu0 0.0
        %789 = vmatpush1.msra.mxu0 0.0
        %790 = vmatprep.subr.mxu0 0.0
        %791 = vmatpush1.msra.mxu0 0.0
        %792 = vmatprep.subr.mxu0 0.0
        %793 = vmatpush1.msra.mxu0 0.0
        %794 = vmatprep.subr.mxu0 0.0
        %795 = vmatpush1.msra.mxu0 0.0
        %796 = vmatprep.subr.mxu0 0.0
        %797 = vmatpush1.msra.mxu0 0.0
        %798 = vmatprep.subr.mxu0 0.0
        %799 = vmatpush1.msra.mxu0 0.0
        %800 = vmatprep.subr.mxu0 0.0
        %801 = vmatpush1.msra.mxu0 0.0
        %802 = vmatprep.subr.mxu0 0.0
        %803 = vmatpush1.msra.mxu0 0.0
        %804 = vmatprep.subr.mxu0 0.0
        %805 = vmatpush1.msra.mxu0 0.0
        %806 = vmatprep.subr.mxu0 0.0
        %807 = vmatpush1.msra.mxu0 0.0
        %808 = vmatprep.subr.mxu0 0.0
        %809 = vmatpush1.msra.mxu0 0.0
        %810 = vmatprep.subr.mxu0 0.0
        %811 = vmatpush1.msra.mxu0 0.0
        %812 = vmatprep.subr.mxu0 0.0
        %813 = vmatpush1.msra.mxu0 0.0
        %814 = vmatprep.subr.mxu0 0.0
        %815 = vmatpush1.msra.mxu0 0.0
        %816 = vmatprep.subr.mxu0 0.0
        %817 = vmatpush1.msra.mxu0 0.0
        %818 = vmatprep.subr.mxu0 0.0
        %819 = vmatpush1.msra.mxu0 0.0
        %820 = vmatprep.subr.mxu0 0.0
        %821 = vmatpush1.msra.mxu0 0.0
        %822 = vmatprep.subr.mxu0 0.0
        %823 = vmatpush1.msra.mxu0 0.0
        %824 = vmatprep.mubr.f32.mxu0 0.0
        %825 = vmatmul.mubr.f32.gmra.mrb[0].mxu0 %v758
        %v826 = vpop.f32.mrb[0].mxu0
        %v827 = vadd.f32 0.0, %v826
        %v828 = vpop.f32.mrb[0].mxu0
        %829 = vdwg.mxu0
        %v830 = vadd.f32 %v757, %v827
        %v831 = vxor.u32 %v830, 2147483648
        %v832 = vmul.f32 %v831, 1.442695
        %v833 = vpow.pop %v832
        %v834 = vadd.f32 %v833, 1.0
        %v835 = vrcp.pop %v834
        %v836 = vmul.f32 1.0, %v835
        %v837 = vtanh.pop %v830
        %839 = vrot.lane.b32.xlu0 %v837, 64
        %v840 = vpop.permute.xlu0 %839
        %v842 = vmul.f32 %v836, %v840
        %844 = vrot.lane.b32.xlu0 %v743, 96
        %v845 = vpop.permute.xlu0 %844
        %v847 = vmul.f32 %v836, %v845
        %849 = vrot.lane.b32.xlu0 %v847, 32
        %v850 = vpop.permute.xlu0 %849
        %v852 = vadd.f32 %v842, %v850
        %v853 = vtanh.pop %v852
        %855 = vrot.lane.b32.xlu0 %v853, 32
        %v856 = vpop.permute.xlu0 %855
        %v858 = vmul.f32 %v836, %v856
        %860 = vrot.lane.b32.xlu0 %v858, 96
        %v861 = vpop.permute.xlu0 %860
        %s863 = scalar_lea.vmem %s272, 24
        %864 = vst.msk [vmem:[%s863] sm:$0xff] %vm292, %v861
        %s865 = scalar_lea.vmem [#allocation2], 32
        %v866 = vld [vmem:[%s865] sm:$0xff]
        %v867 = vsel %vm292, %v861, 0
        %869 = vmatprep.subr.mxu0 0.0
        %870 = vmatpush1.msra.mxu0 %v430
        %871 = vmatprep.subr.mxu0 0.0
        %872 = vmatpush1.msra.mxu0 %v431
        %873 = vmatprep.subr.mxu0 0.0
        %874 = vmatpush1.msra.mxu0 %v432
        %875 = vmatprep.subr.mxu0 0.0
        %876 = vmatpush1.msra.mxu0 %v433
        %877 = vmatprep.subr.mxu0 0.0
        %878 = vmatpush1.msra.mxu0 0.0
        %879 = vmatprep.subr.mxu0 0.0
        %880 = vmatpush1.msra.mxu0 0.0
        %881 = vmatprep.subr.mxu0 0.0
        %882 = vmatpush1.msra.mxu0 0.0
        %883 = vmatprep.subr.mxu0 0.0
        %884 = vmatpush1.msra.mxu0 0.0
        %885 = vmatprep.subr.mxu0 0.0
        %886 = vmatpush1.msra.mxu0 0.0
        %887 = vmatprep.subr.mxu0 0.0
        %888 = vmatpush1.msra.mxu0 0.0
        %889 = vmatprep.subr.mxu0 0.0
        %890 = vmatpush1.msra.mxu0 0.0
        %891 = vmatprep.subr.mxu0 0.0
        %892 = vmatpush1.msra.mxu0 0.0
        %893 = vmatprep.subr.mxu0 0.0
        %894 = vmatpush1.msra.mxu0 0.0
        %895 = vmatprep.subr.mxu0 0.0
        %896 = vmatpush1.msra.mxu0 0.0
        %897 = vmatprep.subr.mxu0 0.0
        %898 = vmatpush1.msra.mxu0 0.0
        %899 = vmatprep.subr.mxu0 0.0
        %900 = vmatpush1.msra.mxu0 0.0
        %901 = vmatprep.subr.mxu0 0.0
        %902 = vmatpush1.msra.mxu0 0.0
        %903 = vmatprep.subr.mxu0 0.0
        %904 = vmatpush1.msra.mxu0 0.0
        %905 = vmatprep.subr.mxu0 0.0
        %906 = vmatpush1.msra.mxu0 0.0
        %907 = vmatprep.subr.mxu0 0.0
        %908 = vmatpush1.msra.mxu0 0.0
        %909 = vmatprep.subr.mxu0 0.0
        %910 = vmatpush1.msra.mxu0 0.0
        %911 = vmatprep.subr.mxu0 0.0
        %912 = vmatpush1.msra.mxu0 0.0
        %913 = vmatprep.subr.mxu0 0.0
        %914 = vmatpush1.msra.mxu0 0.0
        %915 = vmatprep.subr.mxu0 0.0
        %916 = vmatpush1.msra.mxu0 0.0
        %917 = vmatprep.subr.mxu0 0.0
        %918 = vmatpush1.msra.mxu0 0.0
        %919 = vmatprep.subr.mxu0 0.0
        %920 = vmatpush1.msra.mxu0 0.0
        %921 = vmatprep.subr.mxu0 0.0
        %922 = vmatpush1.msra.mxu0 0.0
        %923 = vmatprep.subr.mxu0 0.0
        %924 = vmatpush1.msra.mxu0 0.0
        %925 = vmatprep.subr.mxu0 0.0
        %926 = vmatpush1.msra.mxu0 0.0
        %927 = vmatprep.subr.mxu0 0.0
        %928 = vmatpush1.msra.mxu0 0.0
        %929 = vmatprep.subr.mxu0 0.0
        %930 = vmatpush1.msra.mxu0 0.0
        %931 = vmatprep.subr.mxu0 0.0
        %932 = vmatpush1.msra.mxu0 0.0
        %933 = vmatprep.mubr.f32.mxu0 0.0
        %934 = vmatmul.mubr.f32.gmra.mrb[0].mxu0 %v867
        %v935 = vpop.f32.mrb[0].mxu0
        %v936 = vadd.f32 0.0, %v935
        %v937 = vpop.f32.mrb[0].mxu0
        %938 = vdwg.mxu0
        %v939 = vadd.f32 %v866, %v936
        %v940 = vxor.u32 %v939, 2147483648
        %v941 = vmul.f32 %v940, 1.442695
        %v942 = vpow.pop %v941
        %v943 = vadd.f32 %v942, 1.0
        %v944 = vrcp.pop %v943
        %v945 = vmul.f32 1.0, %v944
        %v946 = vtanh.pop %v939
        %948 = vrot.lane.b32.xlu0 %v946, 64
        %v949 = vpop.permute.xlu0 %948
        %v951 = vmul.f32 %v945, %v949
        %953 = vrot.lane.b32.xlu0 %v852, 96
        %v954 = vpop.permute.xlu0 %953
        %v956 = vmul.f32 %v945, %v954
        %958 = vrot.lane.b32.xlu0 %v956, 32
        %v959 = vpop.permute.xlu0 %958
        %v961 = vadd.f32 %v951, %v959
        %v962 = vtanh.pop %v961
        %964 = vrot.lane.b32.xlu0 %v962, 32
        %v965 = vpop.permute.xlu0 %964
        %v967 = vmul.f32 %v945, %v965
        %969 = vrot.lane.b32.xlu0 %v967, 96
        %v970 = vpop.permute.xlu0 %969
        %s972 = scalar_lea.vmem %s272, 32
        %973 = vst.msk [vmem:[%s972] sm:$0xff] %vm292, %v970
        %s974 = scalar_lea.vmem [#allocation2], 40
        %v975 = vld [vmem:[%s974] sm:$0xff]
        %v976 = vsel %vm292, %v970, 0
        %978 = vmatprep.subr.mxu0 0.0
        %979 = vmatpush1.msra.mxu0 %v430
        %980 = vmatprep.subr.mxu0 0.0
        %981 = vmatpush1.msra.mxu0 %v431
        %982 = vmatprep.subr.mxu0 0.0
        %983 = vmatpush1.msra.mxu0 %v432
        %984 = vmatprep.subr.mxu0 0.0
        %985 = vmatpush1.msra.mxu0 %v433
        %986 = vmatprep.subr.mxu0 0.0
        %987 = vmatpush1.msra.mxu0 0.0
        %988 = vmatprep.subr.mxu0 0.0
        %989 = vmatpush1.msra.mxu0 0.0
        %990 = vmatprep.subr.mxu0 0.0
        %991 = vmatpush1.msra.mxu0 0.0
        %992 = vmatprep.subr.mxu0 0.0
        %993 = vmatpush1.msra.mxu0 0.0
        %994 = vmatprep.subr.mxu0 0.0
        %995 = vmatpush1.msra.mxu0 0.0
        %996 = vmatprep.subr.mxu0 0.0
        %997 = vmatpush1.msra.mxu0 0.0
        %998 = vmatprep.subr.mxu0 0.0
        %999 = vmatpush1.msra.mxu0 0.0
        %1000 = vmatprep.subr.mxu0 0.0
        %1001 = vmatpush1.msra.mxu0 0.0
        %1002 = vmatprep.subr.mxu0 0.0
        %1003 = vmatpush1.msra.mxu0 0.0
        %1004 = vmatprep.subr.mxu0 0.0
        %1005 = vmatpush1.msra.mxu0 0.0
        %1006 = vmatprep.subr.mxu0 0.0
        %1007 = vmatpush1.msra.mxu0 0.0
        %1008 = vmatprep.subr.mxu0 0.0
        %1009 = vmatpush1.msra.mxu0 0.0
        %1010 = vmatprep.subr.mxu0 0.0
        %1011 = vmatpush1.msra.mxu0 0.0
        %1012 = vmatprep.subr.mxu0 0.0
        %1013 = vmatpush1.msra.mxu0 0.0
        %1014 = vmatprep.subr.mxu0 0.0
        %1015 = vmatpush1.msra.mxu0 0.0
        %1016 = vmatprep.subr.mxu0 0.0
        %1017 = vmatpush1.msra.mxu0 0.0
        %1018 = vmatprep.subr.mxu0 0.0
        %1019 = vmatpush1.msra.mxu0 0.0
        %1020 = vmatprep.subr.mxu0 0.0
        %1021 = vmatpush1.msra.mxu0 0.0
        %1022 = vmatprep.subr.mxu0 0.0
        %1023 = vmatpush1.msra.mxu0 0.0
        %1024 = vmatprep.subr.mxu0 0.0
        %1025 = vmatpush1.msra.mxu0 0.0
        %1026 = vmatprep.subr.mxu0 0.0
        %1027 = vmatpush1.msra.mxu0 0.0
        %1028 = vmatprep.subr.mxu0 0.0
        %1029 = vmatpush1.msra.mxu0 0.0
        %1030 = vmatprep.subr.mxu0 0.0
        %1031 = vmatpush1.msra.mxu0 0.0
        %1032 = vmatprep.subr.mxu0 0.0
        %1033 = vmatpush1.msra.mxu0 0.0
        %1034 = vmatprep.subr.mxu0 0.0
        %1035 = vmatpush1.msra.mxu0 0.0
        %1036 = vmatprep.subr.mxu0 0.0
        %1037 = vmatpush1.msra.mxu0 0.0
        %1038 = vmatprep.subr.mxu0 0.0
        %1039 = vmatpush1.msra.mxu0 0.0
        %1040 = vmatprep.subr.mxu0 0.0
        %1041 = vmatpush1.msra.mxu0 0.0
        %1042 = vmatprep.mubr.f32.mxu0 0.0
        %1043 = vmatmul.mubr.f32.gmra.mrb[0].mxu0 %v976
        %v1044 = vpop.f32.mrb[0].mxu0
        %v1045 = vadd.f32 0.0, %v1044
        %v1046 = vpop.f32.mrb[0].mxu0
        %1047 = vdwg.mxu0
        %v1048 = vadd.f32 %v975, %v1045
        %v1049 = vxor.u32 %v1048, 2147483648
        %v1050 = vmul.f32 %v1049, 1.442695
        %v1051 = vpow.pop %v1050
        %v1052 = vadd.f32 %v1051, 1.0
        %v1053 = vrcp.pop %v1052
        %v1054 = vmul.f32 1.0, %v1053
        %v1055 = vtanh.pop %v1048
        %1057 = vrot.lane.b32.xlu0 %v1055, 64
        %v1058 = vpop.permute.xlu0 %1057
        %v1060 = vmul.f32 %v1054, %v1058
        %1062 = vrot.lane.b32.xlu0 %v961, 96
        %v1063 = vpop.permute.xlu0 %1062
        %v1065 = vmul.f32 %v1054, %v1063
        %1067 = vrot.lane.b32.xlu0 %v1065, 32
        %v1068 = vpop.permute.xlu0 %1067
        %v1070 = vadd.f32 %v1060, %v1068
        %v1071 = vtanh.pop %v1070
        %1073 = vrot.lane.b32.xlu0 %v1071, 32
        %v1074 = vpop.permute.xlu0 %1073
        %v1076 = vmul.f32 %v1054, %v1074
        %1078 = vrot.lane.b32.xlu0 %v1076, 96
        %v1079 = vpop.permute.xlu0 %1078
        %s1081 = scalar_lea.vmem %s272, 40
        %1082 = vst.msk [vmem:[%s1081] sm:$0xff] %vm292, %v1079
        %s1083 = scalar_lea.vmem [#allocation2], 48
        %v1084 = vld [vmem:[%s1083] sm:$0xff]
        %v1085 = vsel %vm292, %v1079, 0
        %1087 = vmatprep.subr.mxu0 0.0
        %1088 = vmatpush1.msra.mxu0 %v430
        %1089 = vmatprep.subr.mxu0 0.0
        %1090 = vmatpush1.msra.mxu0 %v431
        %1091 = vmatprep.subr.mxu0 0.0
        %1092 = vmatpush1.msra.mxu0 %v432
        %1093 = vmatprep.subr.mxu0 0.0
        %1094 = vmatpush1.msra.mxu0 %v433
        %1095 = vmatprep.subr.mxu0 0.0
        %1096 = vmatpush1.msra.mxu0 0.0
        %1097 = vmatprep.subr.mxu0 0.0
        %1098 = vmatpush1.msra.mxu0 0.0
        %1099 = vmatprep.subr.mxu0 0.0
        %1100 = vmatpush1.msra.mxu0 0.0
        %1101 = vmatprep.subr.mxu0 0.0
        %1102 = vmatpush1.msra.mxu0 0.0
        %1103 = vmatprep.subr.mxu0 0.0
        %1104 = vmatpush1.msra.mxu0 0.0
        %1105 = vmatprep.subr.mxu0 0.0
        %1106 = vmatpush1.msra.mxu0 0.0
        %1107 = vmatprep.subr.mxu0 0.0
        %1108 = vmatpush1.msra.mxu0 0.0
        %1109 = vmatprep.subr.mxu0 0.0
        %1110 = vmatpush1.msra.mxu0 0.0
        %1111 = vmatprep.subr.mxu0 0.0
        %1112 = vmatpush1.msra.mxu0 0.0
        %1113 = vmatprep.subr.mxu0 0.0
        %1114 = vmatpush1.msra.mxu0 0.0
        %1115 = vmatprep.subr.mxu0 0.0
        %1116 = vmatpush1.msra.mxu0 0.0
        %1117 = vmatprep.subr.mxu0 0.0
        %1118 = vmatpush1.msra.mxu0 0.0
        %1119 = vmatprep.subr.mxu0 0.0
        %1120 = vmatpush1.msra.mxu0 0.0
        %1121 = vmatprep.subr.mxu0 0.0
        %1122 = vmatpush1.msra.mxu0 0.0
        %1123 = vmatprep.subr.mxu0 0.0
        %1124 = vmatpush1.msra.mxu0 0.0
        %1125 = vmatprep.subr.mxu0 0.0
        %1126 = vmatpush1.msra.mxu0 0.0
        %1127 = vmatprep.subr.mxu0 0.0
        %1128 = vmatpush1.msra.mxu0 0.0
        %1129 = vmatprep.subr.mxu0 0.0
        %1130 = vmatpush1.msra.mxu0 0.0
        %1131 = vmatprep.subr.mxu0 0.0
        %1132 = vmatpush1.msra.mxu0 0.0
        %1133 = vmatprep.subr.mxu0 0.0
        %1134 = vmatpush1.msra.mxu0 0.0
        %1135 = vmatprep.subr.mxu0 0.0
        %1136 = vmatpush1.msra.mxu0 0.0
        %1137 = vmatprep.subr.mxu0 0.0
        %1138 = vmatpush1.msra.mxu0 0.0
        %1139 = vmatprep.subr.mxu0 0.0
        %1140 = vmatpush1.msra.mxu0 0.0
        %1141 = vmatprep.subr.mxu0 0.0
        %1142 = vmatpush1.msra.mxu0 0.0
        %1143 = vmatprep.subr.mxu0 0.0
        %1144 = vmatpush1.msra.mxu0 0.0
        %1145 = vmatprep.subr.mxu0 0.0
        %1146 = vmatpush1.msra.mxu0 0.0
        %1147 = vmatprep.subr.mxu0 0.0
        %1148 = vmatpush1.msra.mxu0 0.0
        %1149 = vmatprep.subr.mxu0 0.0
        %1150 = vmatpush1.msra.mxu0 0.0
        %1151 = vmatprep.mubr.f32.mxu0 0.0
        %1152 = vmatmul.mubr.f32.gmra.mrb[0].mxu0 %v1085
        %v1153 = vpop.f32.mrb[0].mxu0
        %v1154 = vadd.f32 0.0, %v1153
        %v1155 = vpop.f32.mrb[0].mxu0
        %1156 = vdwg.mxu0
        %v1157 = vadd.f32 %v1084, %v1154
        %v1158 = vxor.u32 %v1157, 2147483648
        %v1159 = vmul.f32 %v1158, 1.442695
        %v1160 = vpow.pop %v1159
        %v1161 = vadd.f32 %v1160, 1.0
        %v1162 = vrcp.pop %v1161
        %v1163 = vmul.f32 1.0, %v1162
        %v1164 = vtanh.pop %v1157
        %1166 = vrot.lane.b32.xlu0 %v1164, 64
        %v1167 = vpop.permute.xlu0 %1166
        %v1169 = vmul.f32 %v1163, %v1167
        %1171 = vrot.lane.b32.xlu0 %v1070, 96
        %v1172 = vpop.permute.xlu0 %1171
        %v1174 = vmul.f32 %v1163, %v1172
        %1176 = vrot.lane.b32.xlu0 %v1174, 32
        %v1177 = vpop.permute.xlu0 %1176
        %v1179 = vadd.f32 %v1169, %v1177
        %v1180 = vtanh.pop %v1179
        %1182 = vrot.lane.b32.xlu0 %v1180, 32
        %v1183 = vpop.permute.xlu0 %1182
        %v1185 = vmul.f32 %v1163, %v1183
        %1187 = vrot.lane.b32.xlu0 %v1185, 96
        %v1188 = vpop.permute.xlu0 %1187
        %s1190 = scalar_lea.vmem %s272, 48
        %1191 = vst.msk [vmem:[%s1190] sm:$0xff] %vm292, %v1188
        %s1192 = scalar_lea.vmem [#allocation2], 56
        %v1193 = vld [vmem:[%s1192] sm:$0xff]
        %v1194 = vsel %vm292, %v1188, 0
        %1196 = vmatprep.subr.mxu0 0.0
        %1197 = vmatpush1.msra.mxu0 %v430
        %1198 = vmatprep.subr.mxu0 0.0
        %1199 = vmatpush1.msra.mxu0 %v431
        %1200 = vmatprep.subr.mxu0 0.0
        %1201 = vmatpush1.msra.mxu0 %v432
        %1202 = vmatprep.subr.mxu0 0.0
        %1203 = vmatpush1.msra.mxu0 %v433
        %1204 = vmatprep.subr.mxu0 0.0
        %1205 = vmatpush1.msra.mxu0 0.0
        %1206 = vmatprep.subr.mxu0 0.0
        %1207 = vmatpush1.msra.mxu0 0.0
        %1208 = vmatprep.subr.mxu0 0.0
        %1209 = vmatpush1.msra.mxu0 0.0
        %1210 = vmatprep.subr.mxu0 0.0
        %1211 = vmatpush1.msra.mxu0 0.0
        %1212 = vmatprep.subr.mxu0 0.0
        %1213 = vmatpush1.msra.mxu0 0.0
        %1214 = vmatprep.subr.mxu0 0.0
        %1215 = vmatpush1.msra.mxu0 0.0
        %1216 = vmatprep.subr.mxu0 0.0
        %1217 = vmatpush1.msra.mxu0 0.0
        %1218 = vmatprep.subr.mxu0 0.0
        %1219 = vmatpush1.msra.mxu0 0.0
        %1220 = vmatprep.subr.mxu0 0.0
        %1221 = vmatpush1.msra.mxu0 0.0
        %1222 = vmatprep.subr.mxu0 0.0
        %1223 = vmatpush1.msra.mxu0 0.0
        %1224 = vmatprep.subr.mxu0 0.0
        %1225 = vmatpush1.msra.mxu0 0.0
        %1226 = vmatprep.subr.mxu0 0.0
        %1227 = vmatpush1.msra.mxu0 0.0
        %1228 = vmatprep.subr.mxu0 0.0
        %1229 = vmatpush1.msra.mxu0 0.0
        %1230 = vmatprep.subr.mxu0 0.0
        %1231 = vmatpush1.msra.mxu0 0.0
        %1232 = vmatprep.subr.mxu0 0.0
        %1233 = vmatpush1.msra.mxu0 0.0
        %1234 = vmatprep.subr.mxu0 0.0
        %1235 = vmatpush1.msra.mxu0 0.0
        %1236 = vmatprep.subr.mxu0 0.0
        %1237 = vmatpush1.msra.mxu0 0.0
        %1238 = vmatprep.subr.mxu0 0.0
        %1239 = vmatpush1.msra.mxu0 0.0
        %1240 = vmatprep.subr.mxu0 0.0
        %1241 = vmatpush1.msra.mxu0 0.0
        %1242 = vmatprep.subr.mxu0 0.0
        %1243 = vmatpush1.msra.mxu0 0.0
        %1244 = vmatprep.subr.mxu0 0.0
        %1245 = vmatpush1.msra.mxu0 0.0
        %1246 = vmatprep.subr.mxu0 0.0
        %1247 = vmatpush1.msra.mxu0 0.0
        %1248 = vmatprep.subr.mxu0 0.0
        %1249 = vmatpush1.msra.mxu0 0.0
        %1250 = vmatprep.subr.mxu0 0.0
        %1251 = vmatpush1.msra.mxu0 0.0
        %1252 = vmatprep.subr.mxu0 0.0
        %1253 = vmatpush1.msra.mxu0 0.0
        %1254 = vmatprep.subr.mxu0 0.0
        %1255 = vmatpush1.msra.mxu0 0.0
        %1256 = vmatprep.subr.mxu0 0.0
        %1257 = vmatpush1.msra.mxu0 0.0
        %1258 = vmatprep.subr.mxu0 0.0
        %1259 = vmatpush1.msra.mxu0 0.0
        %1260 = vmatprep.mubr.f32.mxu0 0.0
        %1261 = vmatmul.mubr.f32.gmra.mrb[0].mxu0 %v1194
        %v1262 = vpop.f32.mrb[0].mxu0
        %v1263 = vadd.f32 0.0, %v1262
        %v1264 = vpop.f32.mrb[0].mxu0
        %1265 = vdwg.mxu0
        %v1266 = vadd.f32 %v1193, %v1263
        %v1267 = vxor.u32 %v1266, 2147483648
        %v1268 = vmul.f32 %v1267, 1.442695
        %v1269 = vpow.pop %v1268
        %v1270 = vadd.f32 %v1269, 1.0
        %v1271 = vrcp.pop %v1270
        %v1272 = vmul.f32 1.0, %v1271
        %v1273 = vtanh.pop %v1266
        %1275 = vrot.lane.b32.xlu0 %v1273, 64
        %v1276 = vpop.permute.xlu0 %1275
        %v1278 = vmul.f32 %v1272, %v1276
        %1280 = vrot.lane.b32.xlu0 %v1179, 96
        %v1281 = vpop.permute.xlu0 %1280
        %v1283 = vmul.f32 %v1272, %v1281
        %1285 = vrot.lane.b32.xlu0 %v1283, 32
        %v1286 = vpop.permute.xlu0 %1285
        %v1288 = vadd.f32 %v1278, %v1286
        %v1289 = vtanh.pop %v1288
        %1291 = vrot.lane.b32.xlu0 %v1289, 32
        %v1292 = vpop.permute.xlu0 %1291
        %v1294 = vmul.f32 %v1272, %v1292
        %1296 = vrot.lane.b32.xlu0 %v1294, 96
        %v1297 = vpop.permute.xlu0 %1296
        %s1299 = scalar_lea.vmem %s272, 56
        %1300 = vst.msk [vmem:[%s1299] sm:$0xff] %vm292, %v1297
        %1301 = vst.msk [vmem:[%s248] sm:$0xff] %vm292, %v1288
        %1302 = vst.msk [vmem:[%s255] sm:$0xff] %vm292, %v1297
        %s1303 = sand.u32 %s121, 1
        %s1304 = scalar_lea.sflag [#allocation4], %s1303
        %s1305 = sand.u32 %s121, 1
        %s1306 = smul.addr %s1305, 8
        %s1307 = scalar_lea.vmem [#allocation3], %s1306
        %s1308 = sand.u32 %s147, 1
        %s1309 = scalar_lea.sflag [#allocation6], %s1308
        %s1310 = sand.u32 %s147, 1
        %s1311 = smul.addr %s1310, 8
        %s1312 = scalar_lea.vmem [#allocation5], %s1311
        %p1313 = scmp.lt.s32.totalorder %s24, 1
        %s1314 = scalar_select %p1313, %s24, 1
        %s1315 = smul.addr %s1314, 8
        %s1316 = smul.addr %s1315, 8
        %s1317 = scalar_lea.vmem %s6, %s1316
        // Predicated region
        $region37: #{tpu_custom_call.1} parent=35 // pred_check
          %p1318 = pneg %p131
        $region38: #{tpu_custom_call.1} parent=35 // pred_check_branch
          %1320 = sbr.rel (%p1318) target = $region40
        $region39: #{tpu_custom_call.1} parent=35 // pred_region
          %s1322 = ssub.s32 128, 128
          %1323 = vsyncadd %s1304, %s1322
          %s1324 = smul.addr %s24, 128
          %s1325 = scalar_lea.hbm %s4, %s1324
          %s1327 = sshll.u32 %s1307, 4
          %s1328 = int_to_ptr.vmem [resolvable:$true] %s1327
          %1330 = dma.vmem_to_hbm [thread:$0]  %s1328, 128, %s1325, %s1304
        $region40: #{tpu_custom_call.1} parent=35 // pred_fallthru
          _
        // Predicated region
        $region41: #{tpu_custom_call.1} parent=35 // pred_check
          %p1331 = pneg %p157
        $region42: #{tpu_custom_call.1} parent=35 // pred_check_branch
          %1333 = sbr.rel (%p1331) target = $region44
        $region43: #{tpu_custom_call.1} parent=35 // pred_region
          %s1335 = ssub.s32 128, 128
          %1336 = vsyncadd %s1309, %s1335
          %s1337 = smul.addr %s24, 128
          %s1338 = scalar_lea.hbm %s5, %s1337
          %s1340 = sshll.u32 %s1312, 4
          %s1341 = int_to_ptr.vmem [resolvable:$true] %s1340
          %1343 = dma.vmem_to_hbm [thread:$0]  %s1341, 128, %s1338, %s1309
        $region44: #{tpu_custom_call.1} parent=35 // pred_fallthru
          _
        // Predicated region
        $region45: #{tpu_custom_call.1} parent=35 // pred_check
          %p1344 = pneg %p183
        $region46: #{tpu_custom_call.1} parent=35 // pred_check_branch
          %1346 = sbr.rel (%p1344) target = $region48
        $region47: #{tpu_custom_call.1} parent=35 // pred_region
          _
        $region48: #{tpu_custom_call.1} parent=35 // pred_fallthru
          _
      $region36: #{tpu_custom_call.1} parent=5 // pred_fallthru
        _
      %p1347 = scmp.le.s32.totalorder 2, %s19
      // Predicated region
      $region49: #{tpu_custom_call.1} parent=5 // pred_check
        %p1348 = pneg %p1347
      $region50: #{tpu_custom_call.1} parent=5 // pred_check_branch
        %1350 = sbr.rel (%p1348) target = $region52
      $region51: #{tpu_custom_call.1} parent=5 // pred_region
        %s1351 = ssub.s32 %s19, 2
        // Predicated region
        $region53: #{tpu_custom_call.1} parent=51 // pred_check
          %p1352 = pneg %p137
        $region54: #{tpu_custom_call.1} parent=51 // pred_check_branch
          %1354 = sbr.rel (%p1352) target = $region56
        $region55: #{tpu_custom_call.1} parent=51 // pred_region
          %s1355 = sand.u32 %s122, 1
          %s1356 = scalar_lea.sflag [#allocation4], %s1355
          %s1357 = sand.u32 %s122, 1
          %s1358 = smul.addr %s1357, 8
          %s1359 = scalar_lea.vmem [#allocation3], %s1358
          %1360 = dma.done %s1356, 128
        $region56: #{tpu_custom_call.1} parent=51 // pred_fallthru
          _
        // Predicated region
        $region57: #{tpu_custom_call.1} parent=51 // pred_check
          %p1361 = pneg %p163
        $region58: #{tpu_custom_call.1} parent=51 // pred_check_branch
          %1363 = sbr.rel (%p1361) target = $region60
        $region59: #{tpu_custom_call.1} parent=51 // pred_region
          %s1364 = sand.u32 %s148, 1
          %s1365 = scalar_lea.sflag [#allocation6], %s1364
          %s1366 = sand.u32 %s148, 1
          %s1367 = smul.addr %s1366, 8
          %s1368 = scalar_lea.vmem [#allocation5], %s1367
          %1369 = dma.done %s1365, 128
        $region60: #{tpu_custom_call.1} parent=51 // pred_fallthru
          _
        // Predicated region
        $region61: #{tpu_custom_call.1} parent=51 // pred_check
          %p1370 = pneg %p189
        $region62: #{tpu_custom_call.1} parent=51 // pred_check_branch
          %1372 = sbr.rel (%p1370) target = $region64
        $region63: #{tpu_custom_call.1} parent=51 // pred_region
          %p1373 = scmp.lt.s32.totalorder %s25, 1
          %s1374 = scalar_select %p1373, %s25, 1
          %s1375 = smul.addr %s1374, 8
          %s1376 = smul.addr %s1375, 8
          %s1377 = scalar_lea.vmem %s6, %s1376
        $region64: #{tpu_custom_call.1} parent=51 // pred_fallthru
          _
      $region52: #{tpu_custom_call.1} parent=5 // pred_fallthru
        _
    $region6: #{tpu_custom_call.1} parent=1 // loop_footer
      %s23 = sadd.s32 1, %s19
    $region7: #{tpu_custom_call.1} parent=1 // loop_footer_branch
      %18 = sbr.rel target = $region3
    $region8: #{tpu_custom_call.1} parent=1 // loop_exit
      _
    %1378 = vsyncpa [#allocation4], 1
    %s1379 = scalar_lea.sflag [#allocation4], 1
    %1380 = vsyncpa %s1379, 1
    %1381 = vsyncpa [#allocation6], 1
    %s1382 = scalar_lea.sflag [#allocation6], 1
    %1383 = vsyncpa %s1382, 1

</llo_original>
